<compile_context>
chip_gen: v7x
topology: tpu7x:2x2x1
jax: 0.10.0
libtpu: 0.0.40
codegen_flags: <defaults>
</compile_context>

<pallas_src>
import math

import jax
import jax.numpy as jnp
from jax import lax
from jax.experimental import pallas as pl
from jax.experimental.pallas import tpu as pltpu

LANE, SUB = 128, 8


def _round_up(x, m):
    return ((x + m - 1) // m) * m


def _lstm_kernel(d_ref, wih_ref, whh_ref, b_ref, wfc_ref, bfc_ref,
                 out_ref, gx_sc):
    # d_ref:   (T*Bp, Ip)    bf16   time-flattened, batch+lane-padded inputs
    # wih_ref: (Ip, 4*Hp)    bf16   gate-blocked [i,f,o,g], lane-padded
    # whh_ref: (Hp, 4*Hp)    bf16   gate-blocked [i,f,o,g]
    # b_ref:   (1, 4*Hp)     f32    combined b_ih + b_hh, [i,f,o,g]
    # wfc_ref: (Hp, Op)      bf16
    # bfc_ref: (1, Op)       f32    (-1e30 in padded logit columns)
    # out_ref: (Bp, Op)      f32
    # gx_sc:   (T*Bp, 4*Hp)  f32    scratch for the hoisted input projection
    Hp = whh_ref.shape[0]
    Bp = out_ref.shape[0]
    T = d_ref.shape[0] // Bp

    # ---- Phase 1: hoisted input projection for the whole sequence ----------
    # One MXU-efficient matmul instead of T tiny ones on the serial path;
    # the bias is folded in once (not re-broadcast every timestep).
    gx_sc[...] = (jnp.dot(d_ref[...], wih_ref[...],
                          preferred_element_type=jnp.float32)
                  + b_ref[...])

    # ---- Phase 2: sequential LSTM recurrence --------------------------------
    # h is loop-carried in bf16 (MXU operand dtype), c in f32; one fused
    # (Bp,Hp)@(Hp,4Hp) matmul per step; gate slices are whole-vreg because
    # Hp is a multiple of 128.  Gate order is [i, f, o, g] so one sigmoid
    # covers the first 3*Hp lanes and one tanh covers the last Hp lanes.
    def step(t, carry):
        h, c = carry
        base = pl.multiple_of(t * Bp, Bp)          # Bp is a multiple of 8
        gates = gx_sc[pl.ds(base, Bp), :] + jnp.dot(
            h, whh_ref[...], preferred_element_type=jnp.float32)
        sig = jax.nn.sigmoid(gates[:, :3 * Hp])    # i | f | o in one EUP pass
        i_g = sig[:, 0 * Hp:1 * Hp]
        f_g = sig[:, 1 * Hp:2 * Hp]
        o_g = sig[:, 2 * Hp:3 * Hp]
        g_g = jnp.tanh(gates[:, 3 * Hp:4 * Hp])
        c_new = f_g * c + i_g * g_g
        h_new = (o_g * jnp.tanh(c_new)).astype(whh_ref.dtype)
        return h_new, c_new

    h0 = jnp.zeros((Bp, Hp), whh_ref.dtype)
    c0 = jnp.zeros((Bp, Hp), jnp.float32)
    h, _ = lax.fori_loop(0, T, step, (h0, c0), unroll=min(T, 8))

    # ---- Phase 3: final Linear + log-softmax (lane-dense, padded) -----------
    logits = (jnp.dot(h, wfc_ref[...], preferred_element_type=jnp.float32)
              + bfc_ref[...])                          # (Bp, Op)
    m = jnp.max(logits, axis=1, keepdims=True)
    shifted = logits - m
    lse = jnp.log(jnp.sum(jnp.exp(shifted), axis=1, keepdims=True))
    out_ref[...] = shifted - lse


@jax.jit
def rnn_forward(d, w_ih, w_hh, b_ih, b_hh, w_fc, b_fc):
    """d: (seq_len, batch, input_size) f32. Returns (batch, output_size) log-probs."""
    T, B, I = d.shape
    H = w_hh.shape[1]
    O = w_fc.shape[0]

    Hp = _round_up(H, LANE)     # lane-aligned hidden/gate blocks
    Op = _round_up(O, LANE)     # lane-dense output
    Bp = _round_up(B, SUB)      # sublane-aligned batch
    Ip = _round_up(I, LANE)     # lane-dense contraction dim for Phase 1

    f32, bf16 = jnp.float32, jnp.bfloat16
    GATE_PERM = (0, 1, 3, 2)    # torch [i, f, g, o] -> kernel [i, f, o, g]

    # ---- Parameter prep (plain JAX glue, outside the kernel) ----------------
    # Gate-blocked, reordered, zero-padded weights: padded gate columns have
    # zero weight/bias, so padded hidden units stay exactly 0 through the LSTM
    # (i,f,o=sigmoid(0), g=tanh(0)=0 -> c_pad=0, h_pad=0): real outputs are
    # unchanged.
    wih_t = jnp.transpose(w_ih).astype(f32).reshape(I, 4, H)[:, GATE_PERM, :]
    wih_p = (jnp.zeros((Ip, 4, Hp), f32).at[:I, :, :H].set(wih_t)
             .reshape(Ip, 4 * Hp))

    whh_t = jnp.transpose(w_hh).astype(f32).reshape(H, 4, H)[:, GATE_PERM, :]
    whh_p = (jnp.zeros((Hp, 4, Hp), f32).at[:H, :, :H].set(whh_t)
             .reshape(Hp, 4 * Hp))

    b = (b_ih + b_hh).astype(f32).reshape(4, H)[GATE_PERM, :]
    b_p = jnp.zeros((1, 4, Hp), f32).at[0, :, :H].set(b).reshape(1, 4 * Hp)

    wfc_t = jnp.transpose(w_fc).astype(f32)                      # (H, O)
    wfc_p = jnp.zeros((Hp, Op), f32).at[:H, :O].set(wfc_t)
    # -1e30 bias in padded logit columns keeps log-softmax numerically exact.
    bfc_p = jnp.full((1, Op), -1e30, f32).at[0, :O].set(b_fc.astype(f32))

    # Batch/lane-pad and flatten time into rows (row t*Bp + b  <->  (t, b)).
    d_p = jnp.zeros((T, Bp, Ip), f32).at[:, :B, :I].set(d.astype(f32))
    d2 = d_p.reshape(T * Bp, Ip).astype(bf16)

    # bf16 matmul operands (f32 accumulation + f32 cell math inside kernel).
    # NOTE: bf16 W_hh rounding compounds with T; fine at small T, keep W_hh
    # in f32 if tolerance degrades for long sequences.
    wih_p = wih_p.astype(bf16)
    whh_p = whh_p.astype(bf16)
    wfc_p = wfc_p.astype(bf16)

    # ---- Explicit VMEM budget (fail loudly instead of hitting the cap) ------
    def nbytes(shape, itemsize):
        return math.prod(shape) * itemsize

    resident = (nbytes((T * Bp, Ip), 2) + nbytes((Ip, 4 * Hp), 2)
                + nbytes((Hp, 4 * Hp), 2) + nbytes((1, 4 * Hp), 4)
                + nbytes((Hp, Op), 2) + nbytes((1, Op), 4)
                + nbytes((Bp, Op), 4))
    scratch = nbytes((T * Bp, 4 * Hp), 4)
    vmem_limit = max(2 * resident + scratch + (1 << 20), 4 << 20)
    # Keep headroom under the smallest per-core scoped budget (v7x: 64 MiB).
    assert vmem_limit <= (48 << 20), (
        "Resident footprint too large for single-pass kernel; time-chunk the "
        "GX projection (see TODO) for these shapes.")

    out_p = pl.pallas_call(
        _lstm_kernel,
        out_shape=jax.ShapeDtypeStruct((Bp, Op), jnp.float32),
        grid_spec=pltpu.PrefetchScalarGridSpec(
            num_scalar_prefetch=0,
            grid=(1,),                                   # single kernel pass
            in_specs=[
                pl.BlockSpec((T * Bp, Ip), lambda i: (0, 0)),
                pl.BlockSpec((Ip, 4 * Hp), lambda i: (0, 0)),
                pl.BlockSpec((Hp, 4 * Hp), lambda i: (0, 0)),
                pl.BlockSpec((1, 4 * Hp), lambda i: (0, 0)),
                pl.BlockSpec((Hp, Op), lambda i: (0, 0)),
                pl.BlockSpec((1, Op), lambda i: (0, 0)),
            ],
            out_specs=pl.BlockSpec((Bp, Op), lambda i: (0, 0)),
            scratch_shapes=[
                pltpu.VMEM((T * Bp, 4 * Hp), jnp.float32),   # hoisted GX
            ],
        ),
        compiler_params=pltpu.CompilerParams(
            dimension_semantics=("arbitrary",),
            vmem_limit_bytes=int(vmem_limit)),
    )(d2, wih_p, whh_p, b_p, wfc_p, bfc_p)

    return out_p[:B, :O]


def _reference(d, w_ih, w_hh, b_ih, b_hh, w_fc, b_fc):
    """Pure-JAX f32 reference mirroring torch semantics."""
    T, B, _ = d.shape
    H = w_hh.shape[1]
    h = jnp.zeros((B, H), jnp.float32)
    c = jnp.zeros((B, H), jnp.float32)
    for t in range(T):
        gates = d[t] @ w_ih.T + h @ w_hh.T + b_ih + b_hh
        i = jax.nn.sigmoid(gates[:, 0 * H:1 * H])
        f = jax.nn.sigmoid(gates[:, 1 * H:2 * H])
        g = jnp.tanh(gates[:, 2 * H:3 * H])
        o = jax.nn.sigmoid(gates[:, 3 * H:4 * H])
        c = f * c + i * g
        h = o * jnp.tanh(c)
    logits = h @ w_fc.T + b_fc
    return jax.nn.log_softmax(logits, axis=1)


if __name__ == "__main__":
    # Small shapes consistent with the module's forward.
    seq_len, batch, input_size, hidden_size, output_size = 8, 2, 16, 32, 10

    key = jax.random.PRNGKey(0)
    ks = jax.random.split(key, 8)
    bound = 1.0 / jnp.sqrt(hidden_size)   # PyTorch default init range

    d = jax.random.normal(ks[0], (seq_len, batch, input_size), jnp.float32)
    w_ih = jax.random.uniform(ks[1], (4 * hidden_size, input_size), jnp.float32, -bound, bound)
    w_hh = jax.random.uniform(ks[2], (4 * hidden_size, hidden_size), jnp.float32, -bound, bound)
    b_ih = jax.random.uniform(ks[3], (4 * hidden_size,), jnp.float32, -bound, bound)
    b_hh = jax.random.uniform(ks[4], (4 * hidden_size,), jnp.float32, -bound, bound)
    w_fc = jax.random.uniform(ks[5], (output_size, hidden_size), jnp.float32, -bound, bound)
    b_fc = jax.random.uniform(ks[6], (output_size,), jnp.float32, -bound, bound)

    out = rnn_forward(d, w_ih, w_hh, b_ih, b_hh, w_fc, b_fc)
    out = jax.block_until_ready(out)

    ref = _reference(d, w_ih, w_hh, b_ih, b_hh, w_fc, b_fc)
    assert out.shape == (batch, output_size)
    # Loose tolerance: kernel uses bf16 matmul operands (f32 accumulation).
    assert jnp.allclose(out, ref, atol=2e-2, rtol=2e-2), "mismatch vs pure-JAX reference"

    print("KERNEL_OK")
</pallas_src>

<mosaic_0001>
module attributes {stable_mosaic.version = 11 : i64} {
  func.func @_lstm_kernel(%arg0: i32, %arg1: memref<64x128xbf16, #tpu.memory_space<vmem>>, %arg2: memref<128x512xbf16, #tpu.memory_space<vmem>>, %arg3: memref<128x512xbf16, #tpu.memory_space<vmem>>, %arg4: memref<1x512xf32, #tpu.memory_space<vmem>>, %arg5: memref<128x128xbf16, #tpu.memory_space<vmem>>, %arg6: memref<1x128xf32, #tpu.memory_space<vmem>>, %arg7: memref<8x128xf32, #tpu.memory_space<vmem>>, %arg8: memref<64x512xf32, #tpu.memory_space<vmem>>) attributes {dimension_semantics = [#tpu.dimension_semantics<arbitrary>], iteration_bounds = array<i64: 1>, scalar_prefetch = 0 : i64, scratch_operands = 1 : i64, tpu.core_type = #tpu.core_type<tc>, window_params = [{pipeline_mode = #tpu.pipeline_mode<synchronous>, transform_indices = @transform_0, window_bounds = array<i64: 64, 128>}, {pipeline_mode = #tpu.pipeline_mode<synchronous>, transform_indices = @transform_1, window_bounds = array<i64: 128, 512>}, {pipeline_mode = #tpu.pipeline_mode<synchronous>, transform_indices = @transform_2, window_bounds = array<i64: 128, 512>}, {pipeline_mode = #tpu.pipeline_mode<synchronous>, transform_indices = @transform_3, window_bounds = array<i64: 1, 512>}, {pipeline_mode = #tpu.pipeline_mode<synchronous>, transform_indices = @transform_4, window_bounds = array<i64: 128, 128>}, {pipeline_mode = #tpu.pipeline_mode<synchronous>, transform_indices = @transform_5, window_bounds = array<i64: 1, 128>}, {pipeline_mode = #tpu.pipeline_mode<synchronous>, transform_indices = @transform_6, window_bounds = array<i64: 8, 128>}]} {
    %c0 = arith.constant 0 : index
    %c0_0 = arith.constant 0 : index
    %0 = vector.load %arg1[%c0, %c0_0] : memref<64x128xbf16, #tpu.memory_space<vmem>>, vector<64x128xbf16>
    %c0_1 = arith.constant 0 : index
    %c0_2 = arith.constant 0 : index
    %1 = vector.load %arg2[%c0_1, %c0_2] : memref<128x512xbf16, #tpu.memory_space<vmem>>, vector<128x512xbf16>
    %cst = arith.constant dense<0.000000e+00> : vector<64x512xf32>
    %2 = tpu.matmul %0, %1, %cst {dimension_numbers = #tpu.dot_dimension_numbers<[1], [0], [0], [1], [0, 0, 1, 1], [], []>} : vector<64x128xbf16>, vector<128x512xbf16>, vector<64x512xf32> -> vector<64x512xf32>
    %c0_3 = arith.constant 0 : index
    %c0_4 = arith.constant 0 : index
    %3 = vector.load %arg4[%c0_3, %c0_4] : memref<1x512xf32, #tpu.memory_space<vmem>>, vector<1x512xf32>
    %4 = vector.broadcast %3 : vector<1x512xf32> to vector<64x512xf32>
    %5 = arith.addf %2, %4 : vector<64x512xf32>
    %c0_5 = arith.constant 0 : index
    %c0_6 = arith.constant 0 : index
    %6 = vector.load %arg8[%c0_5, %c0_6] : memref<64x512xf32, #tpu.memory_space<vmem>>, vector<64x512xf32>
    tpu.vector_store %arg8[%c0_5, %c0_6], %5 {strides = array<i32>} : memref<64x512xf32, #tpu.memory_space<vmem>>, vector<64x512xf32>,
    %cst_7 = arith.constant 0.000000e+00 : bf16
    %7 = vector.broadcast %cst_7 : bf16 to vector<8x128xbf16>
    %cst_8 = arith.constant 0.000000e+00 : f32
    %8 = vector.broadcast %cst_8 : f32 to vector<8x128xf32>
    %c0_i32 = arith.constant 0 : i32
    %c8_i32 = arith.constant 8 : i32
    %9 = arith.muli %c0_i32, %c8_i32 : i32
    %10 = tpu.assume_multiple %9, 8 : i32
    %11 = arith.index_cast %10 : i32 to index
    %c0_9 = arith.constant 0 : index
    %12 = vector.load %arg8[%11, %c0_9] : memref<64x512xf32, #tpu.memory_space<vmem>>, vector<8x512xf32>
    %c0_10 = arith.constant 0 : index
    %c0_11 = arith.constant 0 : index
    %13 = vector.load %arg3[%c0_10, %c0_11] : memref<128x512xbf16, #tpu.memory_space<vmem>>, vector<128x512xbf16>
    %cst_12 = arith.constant dense<0.000000e+00> : vector<8x512xf32>
    %14 = tpu.matmul %7, %13, %cst_12 {dimension_numbers = #tpu.dot_dimension_numbers<[1], [0], [0], [1], [0, 0, 1, 1], [], []>} : vector<8x128xbf16>, vector<128x512xbf16>, vector<8x512xf32> -> vector<8x512xf32>
    %15 = arith.addf %12, %14 : vector<8x512xf32>
    %16 = vector.extract_strided_slice %15 {offsets = [0, 0], sizes = [8, 384], strides = [1, 1]} : vector<8x512xf32> to vector<8x384xf32>
    %17 = arith.negf %16 : vector<8x384xf32>
    %18 = math.exp %17 : vector<8x384xf32>
    %cst_13 = arith.constant 1.000000e+00 : f32
    %19 = vector.broadcast %cst_13 : f32 to vector<8x384xf32>
    %20 = arith.addf %19, %18 : vector<8x384xf32>
    %21 = arith.divf %19, %20 : vector<8x384xf32>
    %22 = vector.extract_strided_slice %21 {offsets = [0, 0], sizes = [8, 128], strides = [1, 1]} : vector<8x384xf32> to vector<8x128xf32>
    %23 = vector.extract_strided_slice %21 {offsets = [0, 128], sizes = [8, 128], strides = [1, 1]} : vector<8x384xf32> to vector<8x128xf32>
    %24 = vector.extract_strided_slice %21 {offsets = [0, 256], sizes = [8, 128], strides = [1, 1]} : vector<8x384xf32> to vector<8x128xf32>
    %25 = vector.extract_strided_slice %15 {offsets = [0, 384], sizes = [8, 128], strides = [1, 1]} : vector<8x512xf32> to vector<8x128xf32>
    %26 = math.tanh %25 : vector<8x128xf32>
    %27 = arith.mulf %23, %8 : vector<8x128xf32>
    %28 = arith.mulf %22, %26 : vector<8x128xf32>
    %29 = arith.addf %27, %28 : vector<8x128xf32>
    %30 = math.tanh %29 : vector<8x128xf32>
    %31 = arith.mulf %24, %30 : vector<8x128xf32>
    %32 = arith.truncf %31 : vector<8x128xf32> to vector<8x128xbf16>
    %c1_i32 = arith.constant 1 : i32
    %c8_i32_14 = arith.constant 8 : i32
    %33 = arith.muli %c1_i32, %c8_i32_14 : i32
    %34 = tpu.assume_multiple %33, 8 : i32
    %35 = arith.index_cast %34 : i32 to index
    %c0_15 = arith.constant 0 : index
    %36 = vector.load %arg8[%35, %c0_15] : memref<64x512xf32, #tpu.memory_space<vmem>>, vector<8x512xf32>
    %c0_16 = arith.constant 0 : index
    %c0_17 = arith.constant 0 : index
    %37 = vector.load %arg3[%c0_16, %c0_17] : memref<128x512xbf16, #tpu.memory_space<vmem>>, vector<128x512xbf16>
    %cst_18 = arith.constant dense<0.000000e+00> : vector<8x512xf32>
    %38 = tpu.matmul %32, %37, %cst_18 {dimension_numbers = #tpu.dot_dimension_numbers<[1], [0], [0], [1], [0, 0, 1, 1], [], []>} : vector<8x128xbf16>, vector<128x512xbf16>, vector<8x512xf32> -> vector<8x512xf32>
    %39 = arith.addf %36, %38 : vector<8x512xf32>
    %40 = vector.extract_strided_slice %39 {offsets = [0, 0], sizes = [8, 384], strides = [1, 1]} : vector<8x512xf32> to vector<8x384xf32>
    %41 = arith.negf %40 : vector<8x384xf32>
    %42 = math.exp %41 : vector<8x384xf32>
    %cst_19 = arith.constant 1.000000e+00 : f32
    %43 = vector.broadcast %cst_19 : f32 to vector<8x384xf32>
    %44 = arith.addf %43, %42 : vector<8x384xf32>
    %45 = arith.divf %43, %44 : vector<8x384xf32>
    %46 = vector.extract_strided_slice %45 {offsets = [0, 0], sizes = [8, 128], strides = [1, 1]} : vector<8x384xf32> to vector<8x128xf32>
    %47 = vector.extract_strided_slice %45 {offsets = [0, 128], sizes = [8, 128], strides = [1, 1]} : vector<8x384xf32> to vector<8x128xf32>
    %48 = vector.extract_strided_slice %45 {offsets = [0, 256], sizes = [8, 128], strides = [1, 1]} : vector<8x384xf32> to vector<8x128xf32>
    %49 = vector.extract_strided_slice %39 {offsets = [0, 384], sizes = [8, 128], strides = [1, 1]} : vector<8x512xf32> to vector<8x128xf32>
    %50 = math.tanh %49 : vector<8x128xf32>
    %51 = arith.mulf %47, %29 : vector<8x128xf32>
    %52 = arith.mulf %46, %50 : vector<8x128xf32>
    %53 = arith.addf %51, %52 : vector<8x128xf32>
    %54 = math.tanh %53 : vector<8x128xf32>
    %55 = arith.mulf %48, %54 : vector<8x128xf32>
    %56 = arith.truncf %55 : vector<8x128xf32> to vector<8x128xbf16>
    %c2_i32 = arith.constant 2 : i32
    %c8_i32_20 = arith.constant 8 : i32
    %57 = arith.muli %c2_i32, %c8_i32_20 : i32
    %58 = tpu.assume_multiple %57, 8 : i32
    %59 = arith.index_cast %58 : i32 to index
    %c0_21 = arith.constant 0 : index
    %60 = vector.load %arg8[%59, %c0_21] : memref<64x512xf32, #tpu.memory_space<vmem>>, vector<8x512xf32>
    %c0_22 = arith.constant 0 : index
    %c0_23 = arith.constant 0 : index
    %61 = vector.load %arg3[%c0_22, %c0_23] : memref<128x512xbf16, #tpu.memory_space<vmem>>, vector<128x512xbf16>
    %cst_24 = arith.constant dense<0.000000e+00> : vector<8x512xf32>
    %62 = tpu.matmul %56, %61, %cst_24 {dimension_numbers = #tpu.dot_dimension_numbers<[1], [0], [0], [1], [0, 0, 1, 1], [], []>} : vector<8x128xbf16>, vector<128x512xbf16>, vector<8x512xf32> -> vector<8x512xf32>
    %63 = arith.addf %60, %62 : vector<8x512xf32>
    %64 = vector.extract_strided_slice %63 {offsets = [0, 0], sizes = [8, 384], strides = [1, 1]} : vector<8x512xf32> to vector<8x384xf32>
    %65 = arith.negf %64 : vector<8x384xf32>
    %66 = math.exp %65 : vector<8x384xf32>
    %cst_25 = arith.constant 1.000000e+00 : f32
    %67 = vector.broadcast %cst_25 : f32 to vector<8x384xf32>
    %68 = arith.addf %67, %66 : vector<8x384xf32>
    %69 = arith.divf %67, %68 : vector<8x384xf32>
    %70 = vector.extract_strided_slice %69 {offsets = [0, 0], sizes = [8, 128], strides = [1, 1]} : vector<8x384xf32> to vector<8x128xf32>
    %71 = vector.extract_strided_slice %69 {offsets = [0, 128], sizes = [8, 128], strides = [1, 1]} : vector<8x384xf32> to vector<8x128xf32>
    %72 = vector.extract_strided_slice %69 {offsets = [0, 256], sizes = [8, 128], strides = [1, 1]} : vector<8x384xf32> to vector<8x128xf32>
    %73 = vector.extract_strided_slice %63 {offsets = [0, 384], sizes = [8, 128], strides = [1, 1]} : vector<8x512xf32> to vector<8x128xf32>
    %74 = math.tanh %73 : vector<8x128xf32>
    %75 = arith.mulf %71, %53 : vector<8x128xf32>
    %76 = arith.mulf %70, %74 : vector<8x128xf32>
    %77 = arith.addf %75, %76 : vector<8x128xf32>
    %78 = math.tanh %77 : vector<8x128xf32>
    %79 = arith.mulf %72, %78 : vector<8x128xf32>
    %80 = arith.truncf %79 : vector<8x128xf32> to vector<8x128xbf16>
    %c3_i32 = arith.constant 3 : i32
    %c8_i32_26 = arith.constant 8 : i32
    %81 = arith.muli %c3_i32, %c8_i32_26 : i32
    %82 = tpu.assume_multiple %81, 8 : i32
    %83 = arith.index_cast %82 : i32 to index
    %c0_27 = arith.constant 0 : index
    %84 = vector.load %arg8[%83, %c0_27] : memref<64x512xf32, #tpu.memory_space<vmem>>, vector<8x512xf32>
    %c0_28 = arith.constant 0 : index
    %c0_29 = arith.constant 0 : index
    %85 = vector.load %arg3[%c0_28, %c0_29] : memref<128x512xbf16, #tpu.memory_space<vmem>>, vector<128x512xbf16>
    %cst_30 = arith.constant dense<0.000000e+00> : vector<8x512xf32>
    %86 = tpu.matmul %80, %85, %cst_30 {dimension_numbers = #tpu.dot_dimension_numbers<[1], [0], [0], [1], [0, 0, 1, 1], [], []>} : vector<8x128xbf16>, vector<128x512xbf16>, vector<8x512xf32> -> vector<8x512xf32>
    %87 = arith.addf %84, %86 : vector<8x512xf32>
    %88 = vector.extract_strided_slice %87 {offsets = [0, 0], sizes = [8, 384], strides = [1, 1]} : vector<8x512xf32> to vector<8x384xf32>
    %89 = arith.negf %88 : vector<8x384xf32>
    %90 = math.exp %89 : vector<8x384xf32>
    %cst_31 = arith.constant 1.000000e+00 : f32
    %91 = vector.broadcast %cst_31 : f32 to vector<8x384xf32>
    %92 = arith.addf %91, %90 : vector<8x384xf32>
    %93 = arith.divf %91, %92 : vector<8x384xf32>
    %94 = vector.extract_strided_slice %93 {offsets = [0, 0], sizes = [8, 128], strides = [1, 1]} : vector<8x384xf32> to vector<8x128xf32>
    %95 = vector.extract_strided_slice %93 {offsets = [0, 128], sizes = [8, 128], strides = [1, 1]} : vector<8x384xf32> to vector<8x128xf32>
    %96 = vector.extract_strided_slice %93 {offsets = [0, 256], sizes = [8, 128], strides = [1, 1]} : vector<8x384xf32> to vector<8x128xf32>
    %97 = vector.extract_strided_slice %87 {offsets = [0, 384], sizes = [8, 128], strides = [1, 1]} : vector<8x512xf32> to vector<8x128xf32>
    %98 = math.tanh %97 : vector<8x128xf32>
    %99 = arith.mulf %95, %77 : vector<8x128xf32>
    %100 = arith.mulf %94, %98 : vector<8x128xf32>
    %101 = arith.addf %99, %100 : vector<8x128xf32>
    %102 = math.tanh %101 : vector<8x128xf32>
    %103 = arith.mulf %96, %102 : vector<8x128xf32>
    %104 = arith.truncf %103 : vector<8x128xf32> to vector<8x128xbf16>
    %c4_i32 = arith.constant 4 : i32
    %c8_i32_32 = arith.constant 8 : i32
    %105 = arith.muli %c4_i32, %c8_i32_32 : i32
    %106 = tpu.assume_multiple %105, 8 : i32
    %107 = arith.index_cast %106 : i32 to index
    %c0_33 = arith.constant 0 : index
    %108 = vector.load %arg8[%107, %c0_33] : memref<64x512xf32, #tpu.memory_space<vmem>>, vector<8x512xf32>
    %c0_34 = arith.constant 0 : index
    %c0_35 = arith.constant 0 : index
    %109 = vector.load %arg3[%c0_34, %c0_35] : memref<128x512xbf16, #tpu.memory_space<vmem>>, vector<128x512xbf16>
    %cst_36 = arith.constant dense<0.000000e+00> : vector<8x512xf32>
    %110 = tpu.matmul %104, %109, %cst_36 {dimension_numbers = #tpu.dot_dimension_numbers<[1], [0], [0], [1], [0, 0, 1, 1], [], []>} : vector<8x128xbf16>, vector<128x512xbf16>, vector<8x512xf32> -> vector<8x512xf32>
    %111 = arith.addf %108, %110 : vector<8x512xf32>
    %112 = vector.extract_strided_slice %111 {offsets = [0, 0], sizes = [8, 384], strides = [1, 1]} : vector<8x512xf32> to vector<8x384xf32>
    %113 = arith.negf %112 : vector<8x384xf32>
    %114 = math.exp %113 : vector<8x384xf32>
    %cst_37 = arith.constant 1.000000e+00 : f32
    %115 = vector.broadcast %cst_37 : f32 to vector<8x384xf32>
    %116 = arith.addf %115, %114 : vector<8x384xf32>
    %117 = arith.divf %115, %116 : vector<8x384xf32>
    %118 = vector.extract_strided_slice %117 {offsets = [0, 0], sizes = [8, 128], strides = [1, 1]} : vector<8x384xf32> to vector<8x128xf32>
    %119 = vector.extract_strided_slice %117 {offsets = [0, 128], sizes = [8, 128], strides = [1, 1]} : vector<8x384xf32> to vector<8x128xf32>
    %120 = vector.extract_strided_slice %117 {offsets = [0, 256], sizes = [8, 128], strides = [1, 1]} : vector<8x384xf32> to vector<8x128xf32>
    %121 = vector.extract_strided_slice %111 {offsets = [0, 384], sizes = [8, 128], strides = [1, 1]} : vector<8x512xf32> to vector<8x128xf32>
    %122 = math.tanh %121 : vector<8x128xf32>
    %123 = arith.mulf %119, %101 : vector<8x128xf32>
    %124 = arith.mulf %118, %122 : vector<8x128xf32>
    %125 = arith.addf %123, %124 : vector<8x128xf32>
    %126 = math.tanh %125 : vector<8x128xf32>
    %127 = arith.mulf %120, %126 : vector<8x128xf32>
    %128 = arith.truncf %127 : vector<8x128xf32> to vector<8x128xbf16>
    %c5_i32 = arith.constant 5 : i32
    %c8_i32_38 = arith.constant 8 : i32
    %129 = arith.muli %c5_i32, %c8_i32_38 : i32
    %130 = tpu.assume_multiple %129, 8 : i32
    %131 = arith.index_cast %130 : i32 to index
    %c0_39 = arith.constant 0 : index
    %132 = vector.load %arg8[%131, %c0_39] : memref<64x512xf32, #tpu.memory_space<vmem>>, vector<8x512xf32>
    %c0_40 = arith.constant 0 : index
    %c0_41 = arith.constant 0 : index
    %133 = vector.load %arg3[%c0_40, %c0_41] : memref<128x512xbf16, #tpu.memory_space<vmem>>, vector<128x512xbf16>
    %cst_42 = arith.constant dense<0.000000e+00> : vector<8x512xf32>
    %134 = tpu.matmul %128, %133, %cst_42 {dimension_numbers = #tpu.dot_dimension_numbers<[1], [0], [0], [1], [0, 0, 1, 1], [], []>} : vector<8x128xbf16>, vector<128x512xbf16>, vector<8x512xf32> -> vector<8x512xf32>
    %135 = arith.addf %132, %134 : vector<8x512xf32>
    %136 = vector.extract_strided_slice %135 {offsets = [0, 0], sizes = [8, 384], strides = [1, 1]} : vector<8x512xf32> to vector<8x384xf32>
    %137 = arith.negf %136 : vector<8x384xf32>
    %138 = math.exp %137 : vector<8x384xf32>
    %cst_43 = arith.constant 1.000000e+00 : f32
    %139 = vector.broadcast %cst_43 : f32 to vector<8x384xf32>
    %140 = arith.addf %139, %138 : vector<8x384xf32>
    %141 = arith.divf %139, %140 : vector<8x384xf32>
    %142 = vector.extract_strided_slice %141 {offsets = [0, 0], sizes = [8, 128], strides = [1, 1]} : vector<8x384xf32> to vector<8x128xf32>
    %143 = vector.extract_strided_slice %141 {offsets = [0, 128], sizes = [8, 128], strides = [1, 1]} : vector<8x384xf32> to vector<8x128xf32>
    %144 = vector.extract_strided_slice %141 {offsets = [0, 256], sizes = [8, 128], strides = [1, 1]} : vector<8x384xf32> to vector<8x128xf32>
    %145 = vector.extract_strided_slice %135 {offsets = [0, 384], sizes = [8, 128], strides = [1, 1]} : vector<8x512xf32> to vector<8x128xf32>
    %146 = math.tanh %145 : vector<8x128xf32>
    %147 = arith.mulf %143, %125 : vector<8x128xf32>
    %148 = arith.mulf %142, %146 : vector<8x128xf32>
    %149 = arith.addf %147, %148 : vector<8x128xf32>
    %150 = math.tanh %149 : vector<8x128xf32>
    %151 = arith.mulf %144, %150 : vector<8x128xf32>
    %152 = arith.truncf %151 : vector<8x128xf32> to vector<8x128xbf16>
    %c6_i32 = arith.constant 6 : i32
    %c8_i32_44 = arith.constant 8 : i32
    %153 = arith.muli %c6_i32, %c8_i32_44 : i32
    %154 = tpu.assume_multiple %153, 8 : i32
    %155 = arith.index_cast %154 : i32 to index
    %c0_45 = arith.constant 0 : index
    %156 = vector.load %arg8[%155, %c0_45] : memref<64x512xf32, #tpu.memory_space<vmem>>, vector<8x512xf32>
    %c0_46 = arith.constant 0 : index
    %c0_47 = arith.constant 0 : index
    %157 = vector.load %arg3[%c0_46, %c0_47] : memref<128x512xbf16, #tpu.memory_space<vmem>>, vector<128x512xbf16>
    %cst_48 = arith.constant dense<0.000000e+00> : vector<8x512xf32>
    %158 = tpu.matmul %152, %157, %cst_48 {dimension_numbers = #tpu.dot_dimension_numbers<[1], [0], [0], [1], [0, 0, 1, 1], [], []>} : vector<8x128xbf16>, vector<128x512xbf16>, vector<8x512xf32> -> vector<8x512xf32>
    %159 = arith.addf %156, %158 : vector<8x512xf32>
    %160 = vector.extract_strided_slice %159 {offsets = [0, 0], sizes = [8, 384], strides = [1, 1]} : vector<8x512xf32> to vector<8x384xf32>
    %161 = arith.negf %160 : vector<8x384xf32>
    %162 = math.exp %161 : vector<8x384xf32>
    %cst_49 = arith.constant 1.000000e+00 : f32
    %163 = vector.broadcast %cst_49 : f32 to vector<8x384xf32>
    %164 = arith.addf %163, %162 : vector<8x384xf32>
    %165 = arith.divf %163, %164 : vector<8x384xf32>
    %166 = vector.extract_strided_slice %165 {offsets = [0, 0], sizes = [8, 128], strides = [1, 1]} : vector<8x384xf32> to vector<8x128xf32>
    %167 = vector.extract_strided_slice %165 {offsets = [0, 128], sizes = [8, 128], strides = [1, 1]} : vector<8x384xf32> to vector<8x128xf32>
    %168 = vector.extract_strided_slice %165 {offsets = [0, 256], sizes = [8, 128], strides = [1, 1]} : vector<8x384xf32> to vector<8x128xf32>
    %169 = vector.extract_strided_slice %159 {offsets = [0, 384], sizes = [8, 128], strides = [1, 1]} : vector<8x512xf32> to vector<8x128xf32>
    %170 = math.tanh %169 : vector<8x128xf32>
    %171 = arith.mulf %167, %149 : vector<8x128xf32>
    %172 = arith.mulf %166, %170 : vector<8x128xf32>
    %173 = arith.addf %171, %172 : vector<8x128xf32>
    %174 = math.tanh %173 : vector<8x128xf32>
    %175 = arith.mulf %168, %174 : vector<8x128xf32>
    %176 = arith.truncf %175 : vector<8x128xf32> to vector<8x128xbf16>
    %c7_i32 = arith.constant 7 : i32
    %c8_i32_50 = arith.constant 8 : i32
    %177 = arith.muli %c7_i32, %c8_i32_50 : i32
    %178 = tpu.assume_multiple %177, 8 : i32
    %179 = arith.index_cast %178 : i32 to index
    %c0_51 = arith.constant 0 : index
    %180 = vector.load %arg8[%179, %c0_51] : memref<64x512xf32, #tpu.memory_space<vmem>>, vector<8x512xf32>
    %c0_52 = arith.constant 0 : index
    %c0_53 = arith.constant 0 : index
    %181 = vector.load %arg3[%c0_52, %c0_53] : memref<128x512xbf16, #tpu.memory_space<vmem>>, vector<128x512xbf16>
    %cst_54 = arith.constant dense<0.000000e+00> : vector<8x512xf32>
    %182 = tpu.matmul %176, %181, %cst_54 {dimension_numbers = #tpu.dot_dimension_numbers<[1], [0], [0], [1], [0, 0, 1, 1], [], []>} : vector<8x128xbf16>, vector<128x512xbf16>, vector<8x512xf32> -> vector<8x512xf32>
    %183 = arith.addf %180, %182 : vector<8x512xf32>
    %184 = vector.extract_strided_slice %183 {offsets = [0, 0], sizes = [8, 384], strides = [1, 1]} : vector<8x512xf32> to vector<8x384xf32>
    %185 = arith.negf %184 : vector<8x384xf32>
    %186 = math.exp %185 : vector<8x384xf32>
    %cst_55 = arith.constant 1.000000e+00 : f32
    %187 = vector.broadcast %cst_55 : f32 to vector<8x384xf32>
    %188 = arith.addf %187, %186 : vector<8x384xf32>
    %189 = arith.divf %187, %188 : vector<8x384xf32>
    %190 = vector.extract_strided_slice %189 {offsets = [0, 0], sizes = [8, 128], strides = [1, 1]} : vector<8x384xf32> to vector<8x128xf32>
    %191 = vector.extract_strided_slice %189 {offsets = [0, 128], sizes = [8, 128], strides = [1, 1]} : vector<8x384xf32> to vector<8x128xf32>
    %192 = vector.extract_strided_slice %189 {offsets = [0, 256], sizes = [8, 128], strides = [1, 1]} : vector<8x384xf32> to vector<8x128xf32>
    %193 = vector.extract_strided_slice %183 {offsets = [0, 384], sizes = [8, 128], strides = [1, 1]} : vector<8x512xf32> to vector<8x128xf32>
    %194 = math.tanh %193 : vector<8x128xf32>
    %195 = arith.mulf %191, %173 : vector<8x128xf32>
    %196 = arith.mulf %190, %194 : vector<8x128xf32>
    %197 = arith.addf %195, %196 : vector<8x128xf32>
    %198 = math.tanh %197 : vector<8x128xf32>
    %199 = arith.mulf %192, %198 : vector<8x128xf32>
    %200 = arith.truncf %199 : vector<8x128xf32> to vector<8x128xbf16>
    %c8_i32_56 = arith.constant 8 : i32
    %c0_57 = arith.constant 0 : index
    %c0_58 = arith.constant 0 : index
    %201 = vector.load %arg5[%c0_57, %c0_58] : memref<128x128xbf16, #tpu.memory_space<vmem>>, vector<128x128xbf16>
    %cst_59 = arith.constant dense<0.000000e+00> : vector<8x128xf32>
    %202 = tpu.matmul %200, %201, %cst_59 {dimension_numbers = #tpu.dot_dimension_numbers<[1], [0], [0], [1], [0, 0, 1, 1], [], []>} : vector<8x128xbf16>, vector<128x128xbf16>, vector<8x128xf32> -> vector<8x128xf32>
    %c0_60 = arith.constant 0 : index
    %c0_61 = arith.constant 0 : index
    %203 = vector.load %arg6[%c0_60, %c0_61] : memref<1x128xf32, #tpu.memory_space<vmem>>, vector<1x128xf32>
    %204 = vector.broadcast %203 : vector<1x128xf32> to vector<8x128xf32>
    %205 = arith.addf %202, %204 : vector<8x128xf32>
    %cst_62 = arith.constant dense<0xFF800000> : vector<8xf32>
    %206 = vector.multi_reduction <maximumf>, %205, %cst_62 [1] : vector<8x128xf32> to vector<8xf32>
    %207 = vector.shape_cast %206 : vector<8xf32> to vector<8x1xf32>
    %208 = vector.broadcast %207 : vector<8x1xf32> to vector<8x128xf32>
    %209 = arith.subf %205, %208 : vector<8x128xf32>
    %210 = math.exp %209 : vector<8x128xf32>
    %cst_63 = arith.constant dense<0.000000e+00> : vector<8xf32>
    %211 = vector.multi_reduction <add>, %210, %cst_63 [1] : vector<8x128xf32> to vector<8xf32>
    %212 = vector.shape_cast %211 : vector<8xf32> to vector<8x1xf32>
    %213 = math.log %212 : vector<8x1xf32>
    %214 = vector.broadcast %213 : vector<8x1xf32> to vector<8x128xf32>
    %215 = arith.subf %209, %214 : vector<8x128xf32>
    %c0_64 = arith.constant 0 : index
    %c0_65 = arith.constant 0 : index
    %216 = vector.load %arg7[%c0_64, %c0_65] : memref<8x128xf32, #tpu.memory_space<vmem>>, vector<8x128xf32>
    tpu.vector_store %arg7[%c0_64, %c0_65], %215 {strides = array<i32>} : memref<8x128xf32, #tpu.memory_space<vmem>>, vector<8x128xf32>,
    return
  }
  func.func @transform_0(%arg0: i32) -> (i32, i32) {
    %c0_i32 = arith.constant 0 : i32
    %c0_i32_0 = arith.constant 0 : i32
    %c0_i32_1 = arith.constant 0 : i32
    return %c0_i32, %c0_i32_0 : i32, i32
  }
  func.func @transform_1(%arg0: i32) -> (i32, i32) {
    %c0_i32 = arith.constant 0 : i32
    %c0_i32_0 = arith.constant 0 : i32
    %c0_i32_1 = arith.constant 0 : i32
    return %c0_i32, %c0_i32_0 : i32, i32
  }
  func.func @transform_2(%arg0: i32) -> (i32, i32) {
    %c0_i32 = arith.constant 0 : i32
    %c0_i32_0 = arith.constant 0 : i32
    %c0_i32_1 = arith.constant 0 : i32
    return %c0_i32, %c0_i32_0 : i32, i32
  }
  func.func @transform_3(%arg0: i32) -> (i32, i32) {
    %c0_i32 = arith.constant 0 : i32
    %c0_i32_0 = arith.constant 0 : i32
    %c0_i32_1 = arith.constant 0 : i32
    return %c0_i32, %c0_i32_0 : i32, i32
  }
  func.func @transform_4(%arg0: i32) -> (i32, i32) {
    %c0_i32 = arith.constant 0 : i32
    %c0_i32_0 = arith.constant 0 : i32
    %c0_i32_1 = arith.constant 0 : i32
    return %c0_i32, %c0_i32_0 : i32, i32
  }
  func.func @transform_5(%arg0: i32) -> (i32, i32) {
    %c0_i32 = arith.constant 0 : i32
    %c0_i32_0 = arith.constant 0 : i32
    %c0_i32_1 = arith.constant 0 : i32
    return %c0_i32, %c0_i32_0 : i32, i32
  }
  func.func @transform_6(%arg0: i32) -> (i32, i32) {
    %c0_i32 = arith.constant 0 : i32
    %c0_i32_0 = arith.constant 0 : i32
    %c0_i32_1 = arith.constant 0 : i32
    return %c0_i32, %c0_i32_0 : i32, i32
  }
}

</mosaic_0001>

<llo_original>
// kernel: rnn_forward.1
$region0: #{rnn_forward.1}
  #allocation0 [shape = 'u32[]', space=smem, size = 0x4, offset = 0x4, fixed_abs, tag = 'smem constant byte address 0x4 - core index']
  #allocation1 [shape = 'u32[144,128]{1,0:T(1,128)}', space=vmem, size = 0x12000, scoped, tag = 'internal scratch']
  #allocation2 [shape = 'f32[64,512]{1,0:T(8,128)}', space=vmem, size = 0x20000, scoped, tag = 'scratch operand']
  %s0 = inlined_call_operand.vmem [shape: bf16[64,128], index: 0, kind: input, shape index: {}]
  %s1 = inlined_call_operand.vmem [shape: bf16[128,512], index: 1, kind: input, shape index: {}]
  %s2 = inlined_call_operand.vmem [shape: bf16[128,512], index: 2, kind: input, shape index: {}]
  %s3 = inlined_call_operand.vmem [shape: f32[1,512], index: 3, kind: input, shape index: {}]
  %s4 = inlined_call_operand.vmem [shape: bf16[128,128], index: 4, kind: input, shape index: {}]
  %s5 = inlined_call_operand.vmem [shape: f32[1,128], index: 5, kind: input, shape index: {}]
  %s6 = inlined_call_operand.vmem [shape: f32[8,128], index: 6, kind: output, shape index: {}]
  %s7 = sld [smem:[#allocation0]]
  $region34: #{rnn_forward.1} parent=0
    _
  %s9 = ssub.s32 1, %s7
  %s10 = scalar_select 0, %s9, %s7
  // Predicated region
  $region2: #{rnn_forward.1} parent=0 // pred_check
    _
  $region3: #{rnn_forward.1} parent=0 // pred_check_branch
    %12 = sbr.rel (0) target = $region5
  $region4: #{rnn_forward.1} parent=0 // pred_region
    _
  $region5: #{rnn_forward.1} parent=0 // pred_fallthru
    _
  // Predicated region
  $region6: #{rnn_forward.1} parent=0 // pred_check
    _
  $region7: #{rnn_forward.1} parent=0 // pred_check_branch
    %14 = sbr.rel (0) target = $region9
  $region8: #{rnn_forward.1} parent=0 // pred_region
    _
  $region9: #{rnn_forward.1} parent=0 // pred_fallthru
    _
  // Predicated region
  $region10: #{rnn_forward.1} parent=0 // pred_check
    _
  $region11: #{rnn_forward.1} parent=0 // pred_check_branch
    %16 = sbr.rel (0) target = $region13
  $region12: #{rnn_forward.1} parent=0 // pred_region
    _
  $region13: #{rnn_forward.1} parent=0 // pred_fallthru
    _
  // Predicated region
  $region14: #{rnn_forward.1} parent=0 // pred_check
    _
  $region15: #{rnn_forward.1} parent=0 // pred_check_branch
    %18 = sbr.rel (0) target = $region17
  $region16: #{rnn_forward.1} parent=0 // pred_region
    _
  $region17: #{rnn_forward.1} parent=0 // pred_fallthru
    _
  // Predicated region
  $region18: #{rnn_forward.1} parent=0 // pred_check
    _
  $region19: #{rnn_forward.1} parent=0 // pred_check_branch
    %20 = sbr.rel (0) target = $region21
  $region20: #{rnn_forward.1} parent=0 // pred_region
    _
  $region21: #{rnn_forward.1} parent=0 // pred_fallthru
    _
  // Predicated region
  $region22: #{rnn_forward.1} parent=0 // pred_check
    _
  $region23: #{rnn_forward.1} parent=0 // pred_check_branch
    %22 = sbr.rel (0) target = $region25
  $region24: #{rnn_forward.1} parent=0 // pred_region
    _
  $region25: #{rnn_forward.1} parent=0 // pred_fallthru
    _
  %v24 = vld [vmem:[%s0] sm:$0xf]
  %v25 = vld [vmem:[%s0 + $0x4] sm:$0xf]
  %v26 = vld [vmem:[%s0 + $0x8] sm:$0xf]
  %v27 = vld [vmem:[%s0 + $0xc] sm:$0xf]
  %v28 = vld [vmem:[%s0 + $0x10] sm:$0xf]
  %v29 = vld [vmem:[%s0 + $0x14] sm:$0xf]
  %v30 = vld [vmem:[%s0 + $0x18] sm:$0xf]
  %v31 = vld [vmem:[%s0 + $0x1c] sm:$0xf]
  %v32 = vld [vmem:[%s1] sm:$0xff]
  %v33 = vld [vmem:[%s1 + $0x8] sm:$0xff]
  %v34 = vld [vmem:[%s1 + $0x10] sm:$0xff]
  %v35 = vld [vmem:[%s1 + $0x18] sm:$0xff]
  %v36 = vld [vmem:[%s1 + $0x20] sm:$0xff]
  %v37 = vld [vmem:[%s1 + $0x28] sm:$0xff]
  %v38 = vld [vmem:[%s1 + $0x30] sm:$0xff]
  %v39 = vld [vmem:[%s1 + $0x38] sm:$0xff]
  %v40 = vld [vmem:[%s1 + $0x40] sm:$0xff]
  %v41 = vld [vmem:[%s1 + $0x48] sm:$0xff]
  %v42 = vld [vmem:[%s1 + $0x50] sm:$0xff]
  %v43 = vld [vmem:[%s1 + $0x58] sm:$0xff]
  %v44 = vld [vmem:[%s1 + $0x60] sm:$0xff]
  %v45 = vld [vmem:[%s1 + $0x68] sm:$0xff]
  %v46 = vld [vmem:[%s1 + $0x70] sm:$0xff]
  %v47 = vld [vmem:[%s1 + $0x78] sm:$0xff]
  %v48 = vld [vmem:[%s1 + $0x80] sm:$0xff]
  %v49 = vld [vmem:[%s1 + $0x88] sm:$0xff]
  %v50 = vld [vmem:[%s1 + $0x90] sm:$0xff]
  %v51 = vld [vmem:[%s1 + $0x98] sm:$0xff]
  %v52 = vld [vmem:[%s1 + $0xa0] sm:$0xff]
  %v53 = vld [vmem:[%s1 + $0xa8] sm:$0xff]
  %v54 = vld [vmem:[%s1 + $0xb0] sm:$0xff]
  %v55 = vld [vmem:[%s1 + $0xb8] sm:$0xff]
  %v56 = vld [vmem:[%s1 + $0xc0] sm:$0xff]
  %v57 = vld [vmem:[%s1 + $0xc8] sm:$0xff]
  %v58 = vld [vmem:[%s1 + $0xd0] sm:$0xff]
  %v59 = vld [vmem:[%s1 + $0xd8] sm:$0xff]
  %v60 = vld [vmem:[%s1 + $0xe0] sm:$0xff]
  %v61 = vld [vmem:[%s1 + $0xe8] sm:$0xff]
  %v62 = vld [vmem:[%s1 + $0xf0] sm:$0xff]
  %v63 = vld [vmem:[%s1 + $0xf8] sm:$0xff]
  %v64 = vld [vmem:[%s3] sm:$0xf]
  %v66 = vlaneseq
  %v67 = vshrl.u32 %v66, 7
  %v68 = vsub.s32 0, %v67
  %v69 = vrot.slane %v64, %v68
  %v70 = vlaneseq
  %v71 = vshrl.u32 %v70, 7
  %v72 = vsub.s32 1, %v71
  %v73 = vrot.slane %v64, %v72
  %v74 = vlaneseq
  %v75 = vshrl.u32 %v74, 7
  %v76 = vsub.s32 2, %v75
  %v77 = vrot.slane %v64, %v76
  %v78 = vlaneseq
  %v79 = vshrl.u32 %v78, 7
  %v80 = vsub.s32 3, %v79
  %v81 = vrot.slane %v64, %v80
  %v94 = vunpack.c.l.b16 %v24
  %v95 = vunpack.c.l.b16 %v25
  %v96 = vunpack.c.l.b16 %v26
  %v97 = vunpack.c.l.b16 %v27
  %v98 = vunpack.c.l.b16 %v28
  %v99 = vunpack.c.l.b16 %v29
  %v100 = vunpack.c.l.b16 %v30
  %v101 = vunpack.c.l.b16 %v31
  %v102 = vpack.c.b16 %v95, %v94
  %v103 = vpack.c.b16 %v97, %v96
  %v104 = vpack.c.b16 %v99, %v98
  %v105 = vpack.c.b16 %v101, %v100
  %v142 = vunpack.c.l.b16 %v32
  %v143 = vunpack.c.h.b16 %v32
  %v144 = vunpack.c.l.b16 %v33
  %v145 = vunpack.c.h.b16 %v33
  %v146 = vunpack.c.l.b16 %v34
  %v147 = vunpack.c.h.b16 %v34
  %v148 = vunpack.c.l.b16 %v35
  %v149 = vunpack.c.h.b16 %v35
  %v150 = vunpack.c.l.b16 %v36
  %v151 = vunpack.c.h.b16 %v36
  %v152 = vunpack.c.l.b16 %v37
  %v153 = vunpack.c.h.b16 %v37
  %v154 = vunpack.c.l.b16 %v38
  %v155 = vunpack.c.h.b16 %v38
  %v156 = vunpack.c.l.b16 %v39
  %v157 = vunpack.c.h.b16 %v39
  %v158 = vunpack.c.l.b16 %v40
  %v159 = vunpack.c.h.b16 %v40
  %v160 = vunpack.c.l.b16 %v41
  %v161 = vunpack.c.h.b16 %v41
  %v162 = vunpack.c.l.b16 %v42
  %v163 = vunpack.c.h.b16 %v42
  %v164 = vunpack.c.l.b16 %v43
  %v165 = vunpack.c.h.b16 %v43
  %v166 = vunpack.c.l.b16 %v44
  %v167 = vunpack.c.h.b16 %v44
  %v168 = vunpack.c.l.b16 %v45
  %v169 = vunpack.c.h.b16 %v45
  %v170 = vunpack.c.l.b16 %v46
  %v171 = vunpack.c.h.b16 %v46
  %v172 = vunpack.c.l.b16 %v47
  %v173 = vunpack.c.h.b16 %v47
  %v174 = vunpack.c.l.b16 %v48
  %v175 = vunpack.c.h.b16 %v48
  %v176 = vunpack.c.l.b16 %v49
  %v177 = vunpack.c.h.b16 %v49
  %v178 = vunpack.c.l.b16 %v50
  %v179 = vunpack.c.h.b16 %v50
  %v180 = vunpack.c.l.b16 %v51
  %v181 = vunpack.c.h.b16 %v51
  %v182 = vunpack.c.l.b16 %v52
  %v183 = vunpack.c.h.b16 %v52
  %v184 = vunpack.c.l.b16 %v53
  %v185 = vunpack.c.h.b16 %v53
  %v186 = vunpack.c.l.b16 %v54
  %v187 = vunpack.c.h.b16 %v54
  %v188 = vunpack.c.l.b16 %v55
  %v189 = vunpack.c.h.b16 %v55
  %v190 = vunpack.c.l.b16 %v56
  %v191 = vunpack.c.h.b16 %v56
  %v192 = vunpack.c.l.b16 %v57
  %v193 = vunpack.c.h.b16 %v57
  %v194 = vunpack.c.l.b16 %v58
  %v195 = vunpack.c.h.b16 %v58
  %v196 = vunpack.c.l.b16 %v59
  %v197 = vunpack.c.h.b16 %v59
  %v198 = vunpack.c.l.b16 %v60
  %v199 = vunpack.c.h.b16 %v60
  %v200 = vunpack.c.l.b16 %v61
  %v201 = vunpack.c.h.b16 %v61
  %v202 = vunpack.c.l.b16 %v62
  %v203 = vunpack.c.h.b16 %v62
  %v204 = vunpack.c.l.b16 %v63
  %v205 = vunpack.c.h.b16 %v63
  %v206 = vpack.c.b16 %v146, %v142
  %v207 = vpack.c.b16 %v147, %v143
  %v208 = vpack.c.b16 %v148, %v144
  %v209 = vpack.c.b16 %v149, %v145
  %v210 = vpack.c.b16 %v154, %v150
  %v211 = vpack.c.b16 %v155, %v151
  %v212 = vpack.c.b16 %v156, %v152
  %v213 = vpack.c.b16 %v157, %v153
  %v214 = vpack.c.b16 %v162, %v158
  %v215 = vpack.c.b16 %v163, %v159
  %v216 = vpack.c.b16 %v164, %v160
  %v217 = vpack.c.b16 %v165, %v161
  %v218 = vpack.c.b16 %v170, %v166
  %v219 = vpack.c.b16 %v171, %v167
  %v220 = vpack.c.b16 %v172, %v168
  %v221 = vpack.c.b16 %v173, %v169
  %v222 = vpack.c.b16 %v178, %v174
  %v223 = vpack.c.b16 %v179, %v175
  %v224 = vpack.c.b16 %v180, %v176
  %v225 = vpack.c.b16 %v181, %v177
  %v226 = vpack.c.b16 %v186, %v182
  %v227 = vpack.c.b16 %v187, %v183
  %v228 = vpack.c.b16 %v188, %v184
  %v229 = vpack.c.b16 %v189, %v185
  %v230 = vpack.c.b16 %v194, %v190
  %v231 = vpack.c.b16 %v195, %v191
  %v232 = vpack.c.b16 %v196, %v192
  %v233 = vpack.c.b16 %v197, %v193
  %v234 = vpack.c.b16 %v202, %v198
  %v235 = vpack.c.b16 %v203, %v199
  %v236 = vpack.c.b16 %v204, %v200
  %v237 = vpack.c.b16 %v205, %v201
  %270 = vmatprep.subr.bf16.mxu0 %v207
  %271 = vmatpush1.bf16.msra.mxu0 %v206
  %272 = vmatprep.subr.bf16.mxu0 %v211
  %273 = vmatpush1.bf16.msra.mxu0 %v210
  %274 = vmatprep.subr.bf16.mxu0 %v215
  %275 = vmatpush1.bf16.msra.mxu0 %v214
  %276 = vmatprep.subr.bf16.mxu0 %v219
  %277 = vmatpush1.bf16.msra.mxu0 %v218
  %278 = vmatprep.subr.bf16.mxu0 %v223
  %279 = vmatpush1.bf16.msra.mxu0 %v222
  %280 = vmatprep.subr.bf16.mxu0 %v227
  %281 = vmatpush1.bf16.msra.mxu0 %v226
  %282 = vmatprep.subr.bf16.mxu0 %v231
  %283 = vmatpush1.bf16.msra.mxu0 %v230
  %284 = vmatprep.subr.bf16.mxu0 %v235
  %285 = vmatpush1.bf16.msra.mxu0 %v234
  %286 = vmatprep.subr.bf16.mxu0 0
  %287 = vmatpush1.bf16.msra.mxu0 0
  %288 = vmatprep.subr.bf16.mxu0 0
  %289 = vmatpush1.bf16.msra.mxu0 0
  %290 = vmatprep.subr.bf16.mxu0 0
  %291 = vmatpush1.bf16.msra.mxu0 0
  %292 = vmatprep.subr.bf16.mxu0 0
  %293 = vmatpush1.bf16.msra.mxu0 0
  %294 = vmatprep.subr.bf16.mxu0 0
  %295 = vmatpush1.bf16.msra.mxu0 0
  %296 = vmatprep.subr.bf16.mxu0 0
  %297 = vmatpush1.bf16.msra.mxu0 0
  %298 = vmatprep.subr.bf16.mxu0 0
  %299 = vmatpush1.bf16.msra.mxu0 0
  %300 = vmatprep.subr.bf16.mxu0 0
  %301 = vmatpush1.bf16.msra.mxu0 0
  %302 = vmatprep.mubr.bf16.mxu0 0
  %303 = vmatmul.mubr.bf16.gmra.mrb[0].mxu0 %v102
  %v304 = vpop.f32.mrb[0].mxu0
  %v305 = vadd.f32 %v69, %v304
  %v306 = vpop.f32.mrb[0].mxu0
  %v307 = vadd.f32 %v73, %v306
  %v308 = vpop.f32.mrb[0].mxu0
  %v309 = vadd.f32 %v69, %v308
  %v310 = vpop.f32.mrb[0].mxu0
  %v311 = vadd.f32 %v73, %v310
  %312 = vmatprep.mubr.bf16.mxu0 0
  %313 = vmatmul.mubr.bf16.gmra.mrb[0].mxu0 %v103
  %v314 = vpop.f32.mrb[0].mxu0
  %v315 = vadd.f32 %v69, %v314
  %v316 = vpop.f32.mrb[0].mxu0
  %v317 = vadd.f32 %v73, %v316
  %v318 = vpop.f32.mrb[0].mxu0
  %v319 = vadd.f32 %v69, %v318
  %v320 = vpop.f32.mrb[0].mxu0
  %v321 = vadd.f32 %v73, %v320
  %322 = vmatprep.mubr.bf16.mxu0 0
  %323 = vmatmul.mubr.bf16.gmra.mrb[0].mxu0 %v104
  %v324 = vpop.f32.mrb[0].mxu0
  %v325 = vadd.f32 %v69, %v324
  %v326 = vpop.f32.mrb[0].mxu0
  %v327 = vadd.f32 %v73, %v326
  %v328 = vpop.f32.mrb[0].mxu0
  %v329 = vadd.f32 %v69, %v328
  %v330 = vpop.f32.mrb[0].mxu0
  %v331 = vadd.f32 %v73, %v330
  %332 = vmatprep.mubr.bf16.mxu0 0
  %333 = vmatmul.mubr.bf16.gmra.mrb[0].mxu0 %v105
  %v334 = vpop.f32.mrb[0].mxu0
  %v335 = vadd.f32 %v69, %v334
  %v336 = vpop.f32.mrb[0].mxu0
  %v337 = vadd.f32 %v73, %v336
  %v338 = vpop.f32.mrb[0].mxu0
  %v339 = vadd.f32 %v69, %v338
  %v340 = vpop.f32.mrb[0].mxu0
  %v341 = vadd.f32 %v73, %v340
  %342 = vdwg.mxu0
  %343 = vmatprep.subr.bf16.mxu0 %v209
  %344 = vmatpush1.bf16.msra.mxu0 %v208
  %345 = vmatprep.subr.bf16.mxu0 %v213
  %346 = vmatpush1.bf16.msra.mxu0 %v212
  %347 = vmatprep.subr.bf16.mxu0 %v217
  %348 = vmatpush1.bf16.msra.mxu0 %v216
  %349 = vmatprep.subr.bf16.mxu0 %v221
  %350 = vmatpush1.bf16.msra.mxu0 %v220
  %351 = vmatprep.subr.bf16.mxu0 %v225
  %352 = vmatpush1.bf16.msra.mxu0 %v224
  %353 = vmatprep.subr.bf16.mxu0 %v229
  %354 = vmatpush1.bf16.msra.mxu0 %v228
  %355 = vmatprep.subr.bf16.mxu0 %v233
  %356 = vmatpush1.bf16.msra.mxu0 %v232
  %357 = vmatprep.subr.bf16.mxu0 %v237
  %358 = vmatpush1.bf16.msra.mxu0 %v236
  %359 = vmatprep.subr.bf16.mxu0 0
  %360 = vmatpush1.bf16.msra.mxu0 0
  %361 = vmatprep.subr.bf16.mxu0 0
  %362 = vmatpush1.bf16.msra.mxu0 0
  %363 = vmatprep.subr.bf16.mxu0 0
  %364 = vmatpush1.bf16.msra.mxu0 0
  %365 = vmatprep.subr.bf16.mxu0 0
  %366 = vmatpush1.bf16.msra.mxu0 0
  %367 = vmatprep.subr.bf16.mxu0 0
  %368 = vmatpush1.bf16.msra.mxu0 0
  %369 = vmatprep.subr.bf16.mxu0 0
  %370 = vmatpush1.bf16.msra.mxu0 0
  %371 = vmatprep.subr.bf16.mxu0 0
  %372 = vmatpush1.bf16.msra.mxu0 0
  %373 = vmatprep.subr.bf16.mxu0 0
  %374 = vmatpush1.bf16.msra.mxu0 0
  %375 = vmatprep.mubr.bf16.mxu0 0
  %376 = vmatmul.mubr.bf16.gmra.mrb[0].mxu0 %v102
  %v377 = vpop.f32.mrb[0].mxu0
  %v378 = vadd.f32 %v77, %v377
  %v379 = vpop.f32.mrb[0].mxu0
  %v380 = vadd.f32 %v81, %v379
  %v381 = vpop.f32.mrb[0].mxu0
  %v382 = vadd.f32 %v77, %v381
  %v383 = vpop.f32.mrb[0].mxu0
  %v384 = vadd.f32 %v81, %v383
  %385 = vmatprep.mubr.bf16.mxu0 0
  %386 = vmatmul.mubr.bf16.gmra.mrb[0].mxu0 %v103
  %v387 = vpop.f32.mrb[0].mxu0
  %v388 = vadd.f32 %v77, %v387
  %v389 = vpop.f32.mrb[0].mxu0
  %v390 = vadd.f32 %v81, %v389
  %v391 = vpop.f32.mrb[0].mxu0
  %v392 = vadd.f32 %v77, %v391
  %v393 = vpop.f32.mrb[0].mxu0
  %v394 = vadd.f32 %v81, %v393
  %395 = vmatprep.mubr.bf16.mxu0 0
  %396 = vmatmul.mubr.bf16.gmra.mrb[0].mxu0 %v104
  %v397 = vpop.f32.mrb[0].mxu0
  %v398 = vadd.f32 %v77, %v397
  %v399 = vpop.f32.mrb[0].mxu0
  %v400 = vadd.f32 %v81, %v399
  %v401 = vpop.f32.mrb[0].mxu0
  %v402 = vadd.f32 %v77, %v401
  %v403 = vpop.f32.mrb[0].mxu0
  %v404 = vadd.f32 %v81, %v403
  %405 = vmatprep.mubr.bf16.mxu0 0
  %406 = vmatmul.mubr.bf16.gmra.mrb[0].mxu0 %v105
  %v407 = vpop.f32.mrb[0].mxu0
  %v408 = vadd.f32 %v77, %v407
  %v409 = vpop.f32.mrb[0].mxu0
  %v410 = vadd.f32 %v81, %v409
  %v411 = vpop.f32.mrb[0].mxu0
  %v412 = vadd.f32 %v77, %v411
  %v413 = vpop.f32.mrb[0].mxu0
  %v414 = vadd.f32 %v81, %v413
  %415 = vdwg.mxu0
  %416 = vst [vmem:[#allocation2] sm:$0xff] %v305
  %417 = vst [vmem:[#allocation2 + $0x8] sm:$0xff] %v307
  %418 = vst [vmem:[#allocation2 + $0x10] sm:$0xff] %v378
  %419 = vst [vmem:[#allocation2 + $0x18] sm:$0xff] %v380
  %420 = vst [vmem:[#allocation2 + $0x20] sm:$0xff] %v309
  %421 = vst [vmem:[#allocation2 + $0x28] sm:$0xff] %v311
  %422 = vst [vmem:[#allocation2 + $0x30] sm:$0xff] %v382
  %423 = vst [vmem:[#allocation2 + $0x38] sm:$0xff] %v384
  %424 = vst [vmem:[#allocation2 + $0x40] sm:$0xff] %v315
  %425 = vst [vmem:[#allocation2 + $0x48] sm:$0xff] %v317
  %426 = vst [vmem:[#allocation2 + $0x50] sm:$0xff] %v388
  %427 = vst [vmem:[#allocation2 + $0x58] sm:$0xff] %v390
  %428 = vst [vmem:[#allocation2 + $0x60] sm:$0xff] %v319
  %429 = vst [vmem:[#allocation2 + $0x68] sm:$0xff] %v321
  %430 = vst [vmem:[#allocation2 + $0x70] sm:$0xff] %v392
  %431 = vst [vmem:[#allocation2 + $0x78] sm:$0xff] %v394
  %432 = vst [vmem:[#allocation2 + $0x80] sm:$0xff] %v325
  %433 = vst [vmem:[#allocation2 + $0x88] sm:$0xff] %v327
  %434 = vst [vmem:[#allocation2 + $0x90] sm:$0xff] %v398
  %435 = vst [vmem:[#allocation2 + $0x98] sm:$0xff] %v400
  %436 = vst [vmem:[#allocation2 + $0xa0] sm:$0xff] %v329
  %437 = vst [vmem:[#allocation2 + $0xa8] sm:$0xff] %v331
  %438 = vst [vmem:[#allocation2 + $0xb0] sm:$0xff] %v402
  %439 = vst [vmem:[#allocation2 + $0xb8] sm:$0xff] %v404
  %440 = vst [vmem:[#allocation2 + $0xc0] sm:$0xff] %v335
  %441 = vst [vmem:[#allocation2 + $0xc8] sm:$0xff] %v337
  %442 = vst [vmem:[#allocation2 + $0xd0] sm:$0xff] %v408
  %443 = vst [vmem:[#allocation2 + $0xd8] sm:$0xff] %v410
  %444 = vst [vmem:[#allocation2 + $0xe0] sm:$0xff] %v339
  %445 = vst [vmem:[#allocation2 + $0xe8] sm:$0xff] %v341
  %446 = vst [vmem:[#allocation2 + $0xf0] sm:$0xff] %v412
  %447 = vst [vmem:[#allocation2 + $0xf8] sm:$0xff] %v414
  %s448 = smul.u32 0, 4
  %s449 = smul.addr %s448, 8
  %s450 = scalar_lea.vmem [#allocation2], %s449
  %v451 = vld [vmem:[%s450] sm:$0xff]
  %v452 = vld [vmem:[%s450 + $0x8] sm:$0xff]
  %v453 = vld [vmem:[%s450 + $0x10] sm:$0xff]
  %v454 = vld [vmem:[%s450 + $0x18] sm:$0xff]
  %v455 = vld [vmem:[%s2] sm:$0xff]
  %v456 = vld [vmem:[%s2 + $0x8] sm:$0xff]
  %v457 = vld [vmem:[%s2 + $0x10] sm:$0xff]
  %v458 = vld [vmem:[%s2 + $0x18] sm:$0xff]
  %v459 = vld [vmem:[%s2 + $0x20] sm:$0xff]
  %v460 = vld [vmem:[%s2 + $0x28] sm:$0xff]
  %v461 = vld [vmem:[%s2 + $0x30] sm:$0xff]
  %v462 = vld [vmem:[%s2 + $0x38] sm:$0xff]
  %v463 = vld [vmem:[%s2 + $0x40] sm:$0xff]
  %v464 = vld [vmem:[%s2 + $0x48] sm:$0xff]
  %v465 = vld [vmem:[%s2 + $0x50] sm:$0xff]
  %v466 = vld [vmem:[%s2 + $0x58] sm:$0xff]
  %v467 = vld [vmem:[%s2 + $0x60] sm:$0xff]
  %v468 = vld [vmem:[%s2 + $0x68] sm:$0xff]
  %v469 = vld [vmem:[%s2 + $0x70] sm:$0xff]
  %v470 = vld [vmem:[%s2 + $0x78] sm:$0xff]
  %v471 = vld [vmem:[%s2 + $0x80] sm:$0xff]
  %v472 = vld [vmem:[%s2 + $0x88] sm:$0xff]
  %v473 = vld [vmem:[%s2 + $0x90] sm:$0xff]
  %v474 = vld [vmem:[%s2 + $0x98] sm:$0xff]
  %v475 = vld [vmem:[%s2 + $0xa0] sm:$0xff]
  %v476 = vld [vmem:[%s2 + $0xa8] sm:$0xff]
  %v477 = vld [vmem:[%s2 + $0xb0] sm:$0xff]
  %v478 = vld [vmem:[%s2 + $0xb8] sm:$0xff]
  %v479 = vld [vmem:[%s2 + $0xc0] sm:$0xff]
  %v480 = vld [vmem:[%s2 + $0xc8] sm:$0xff]
  %v481 = vld [vmem:[%s2 + $0xd0] sm:$0xff]
  %v482 = vld [vmem:[%s2 + $0xd8] sm:$0xff]
  %v483 = vld [vmem:[%s2 + $0xe0] sm:$0xff]
  %v484 = vld [vmem:[%s2 + $0xe8] sm:$0xff]
  %v485 = vld [vmem:[%s2 + $0xf0] sm:$0xff]
  %v486 = vld [vmem:[%s2 + $0xf8] sm:$0xff]
  %v519 = vunpack.c.l.b16 %v455
  %v520 = vunpack.c.h.b16 %v455
  %v521 = vunpack.c.l.b16 %v456
  %v522 = vunpack.c.h.b16 %v456
  %v523 = vunpack.c.l.b16 %v457
  %v524 = vunpack.c.h.b16 %v457
  %v525 = vunpack.c.l.b16 %v458
  %v526 = vunpack.c.h.b16 %v458
  %v527 = vunpack.c.l.b16 %v459
  %v528 = vunpack.c.h.b16 %v459
  %v529 = vunpack.c.l.b16 %v460
  %v530 = vunpack.c.h.b16 %v460
  %v531 = vunpack.c.l.b16 %v461
  %v532 = vunpack.c.h.b16 %v461
  %v533 = vunpack.c.l.b16 %v462
  %v534 = vunpack.c.h.b16 %v462
  %v535 = vunpack.c.l.b16 %v463
  %v536 = vunpack.c.h.b16 %v463
  %v537 = vunpack.c.l.b16 %v464
  %v538 = vunpack.c.h.b16 %v464
  %v539 = vunpack.c.l.b16 %v465
  %v540 = vunpack.c.h.b16 %v465
  %v541 = vunpack.c.l.b16 %v466
  %v542 = vunpack.c.h.b16 %v466
  %v543 = vunpack.c.l.b16 %v467
  %v544 = vunpack.c.h.b16 %v467
  %v545 = vunpack.c.l.b16 %v468
  %v546 = vunpack.c.h.b16 %v468
  %v547 = vunpack.c.l.b16 %v469
  %v548 = vunpack.c.h.b16 %v469
  %v549 = vunpack.c.l.b16 %v470
  %v550 = vunpack.c.h.b16 %v470
  %v551 = vunpack.c.l.b16 %v471
  %v552 = vunpack.c.h.b16 %v471
  %v553 = vunpack.c.l.b16 %v472
  %v554 = vunpack.c.h.b16 %v472
  %v555 = vunpack.c.l.b16 %v473
  %v556 = vunpack.c.h.b16 %v473
  %v557 = vunpack.c.l.b16 %v474
  %v558 = vunpack.c.h.b16 %v474
  %v559 = vunpack.c.l.b16 %v475
  %v560 = vunpack.c.h.b16 %v475
  %v561 = vunpack.c.l.b16 %v476
  %v562 = vunpack.c.h.b16 %v476
  %v563 = vunpack.c.l.b16 %v477
  %v564 = vunpack.c.h.b16 %v477
  %v565 = vunpack.c.l.b16 %v478
  %v566 = vunpack.c.h.b16 %v478
  %v567 = vunpack.c.l.b16 %v479
  %v568 = vunpack.c.h.b16 %v479
  %v569 = vunpack.c.l.b16 %v480
  %v570 = vunpack.c.h.b16 %v480
  %v571 = vunpack.c.l.b16 %v481
  %v572 = vunpack.c.h.b16 %v481
  %v573 = vunpack.c.l.b16 %v482
  %v574 = vunpack.c.h.b16 %v482
  %v575 = vunpack.c.l.b16 %v483
  %v576 = vunpack.c.h.b16 %v483
  %v577 = vunpack.c.l.b16 %v484
  %v578 = vunpack.c.h.b16 %v484
  %v579 = vunpack.c.l.b16 %v485
  %v580 = vunpack.c.h.b16 %v485
  %v581 = vunpack.c.l.b16 %v486
  %v582 = vunpack.c.h.b16 %v486
  %v583 = vpack.c.b16 %v523, %v519
  %v584 = vpack.c.b16 %v524, %v520
  %v585 = vpack.c.b16 %v525, %v521
  %v586 = vpack.c.b16 %v526, %v522
  %v587 = vpack.c.b16 %v531, %v527
  %v588 = vpack.c.b16 %v532, %v528
  %v589 = vpack.c.b16 %v533, %v529
  %v590 = vpack.c.b16 %v534, %v530
  %v591 = vpack.c.b16 %v539, %v535
  %v592 = vpack.c.b16 %v540, %v536
  %v593 = vpack.c.b16 %v541, %v537
  %v594 = vpack.c.b16 %v542, %v538
  %v595 = vpack.c.b16 %v547, %v543
  %v596 = vpack.c.b16 %v548, %v544
  %v597 = vpack.c.b16 %v549, %v545
  %v598 = vpack.c.b16 %v550, %v546
  %v599 = vpack.c.b16 %v555, %v551
  %v600 = vpack.c.b16 %v556, %v552
  %v601 = vpack.c.b16 %v557, %v553
  %v602 = vpack.c.b16 %v558, %v554
  %v603 = vpack.c.b16 %v563, %v559
  %v604 = vpack.c.b16 %v564, %v560
  %v605 = vpack.c.b16 %v565, %v561
  %v606 = vpack.c.b16 %v566, %v562
  %v607 = vpack.c.b16 %v571, %v567
  %v608 = vpack.c.b16 %v572, %v568
  %v609 = vpack.c.b16 %v573, %v569
  %v610 = vpack.c.b16 %v574, %v570
  %v611 = vpack.c.b16 %v579, %v575
  %v612 = vpack.c.b16 %v580, %v576
  %v613 = vpack.c.b16 %v581, %v577
  %v614 = vpack.c.b16 %v582, %v578
  %647 = vmatprep.subr.bf16.mxu0 %v584
  %648 = vmatpush1.bf16.msra.mxu0 %v583
  %649 = vmatprep.subr.bf16.mxu0 %v588
  %650 = vmatpush1.bf16.msra.mxu0 %v587
  %651 = vmatprep.subr.bf16.mxu0 %v592
  %652 = vmatpush1.bf16.msra.mxu0 %v591
  %653 = vmatprep.subr.bf16.mxu0 %v596
  %654 = vmatpush1.bf16.msra.mxu0 %v595
  %655 = vmatprep.subr.bf16.mxu0 %v600
  %656 = vmatpush1.bf16.msra.mxu0 %v599
  %657 = vmatprep.subr.bf16.mxu0 %v604
  %658 = vmatpush1.bf16.msra.mxu0 %v603
  %659 = vmatprep.subr.bf16.mxu0 %v608
  %660 = vmatpush1.bf16.msra.mxu0 %v607
  %661 = vmatprep.subr.bf16.mxu0 %v612
  %662 = vmatpush1.bf16.msra.mxu0 %v611
  %663 = vmatprep.subr.bf16.mxu0 0
  %664 = vmatpush1.bf16.msra.mxu0 0
  %665 = vmatprep.subr.bf16.mxu0 0
  %666 = vmatpush1.bf16.msra.mxu0 0
  %667 = vmatprep.subr.bf16.mxu0 0
  %668 = vmatpush1.bf16.msra.mxu0 0
  %669 = vmatprep.subr.bf16.mxu0 0
  %670 = vmatpush1.bf16.msra.mxu0 0
  %671 = vmatprep.subr.bf16.mxu0 0
  %672 = vmatpush1.bf16.msra.mxu0 0
  %673 = vmatprep.subr.bf16.mxu0 0
  %674 = vmatpush1.bf16.msra.mxu0 0
  %675 = vmatprep.subr.bf16.mxu0 0
  %676 = vmatpush1.bf16.msra.mxu0 0
  %677 = vmatprep.subr.bf16.mxu0 0
  %678 = vmatpush1.bf16.msra.mxu0 0
  %679 = vmatprep.mubr.bf16.mxu0 0
  %680 = vmatmul.mubr.bf16.gmra.mrb[0].mxu0 0
  %v681 = vpop.f32.mrb[0].mxu0
  %v682 = vadd.f32 0.0, %v681
  %v683 = vpop.f32.mrb[0].mxu0
  %v684 = vadd.f32 0.0, %v683
  %v685 = vpop.f32.mrb[0].mxu0
  %v686 = vpop.f32.mrb[0].mxu0
  %687 = vdwg.mxu0
  %688 = vmatprep.subr.bf16.mxu0 %v586
  %689 = vmatpush1.bf16.msra.mxu0 %v585
  %690 = vmatprep.subr.bf16.mxu0 %v590
  %691 = vmatpush1.bf16.msra.mxu0 %v589
  %692 = vmatprep.subr.bf16.mxu0 %v594
  %693 = vmatpush1.bf16.msra.mxu0 %v593
  %694 = vmatprep.subr.bf16.mxu0 %v598
  %695 = vmatpush1.bf16.msra.mxu0 %v597
  %696 = vmatprep.subr.bf16.mxu0 %v602
  %697 = vmatpush1.bf16.msra.mxu0 %v601
  %698 = vmatprep.subr.bf16.mxu0 %v606
  %699 = vmatpush1.bf16.msra.mxu0 %v605
  %700 = vmatprep.subr.bf16.mxu0 %v610
  %701 = vmatpush1.bf16.msra.mxu0 %v609
  %702 = vmatprep.subr.bf16.mxu0 %v614
  %703 = vmatpush1.bf16.msra.mxu0 %v613
  %704 = vmatprep.subr.bf16.mxu0 0
  %705 = vmatpush1.bf16.msra.mxu0 0
  %706 = vmatprep.subr.bf16.mxu0 0
  %707 = vmatpush1.bf16.msra.mxu0 0
  %708 = vmatprep.subr.bf16.mxu0 0
  %709 = vmatpush1.bf16.msra.mxu0 0
  %710 = vmatprep.subr.bf16.mxu0 0
  %711 = vmatpush1.bf16.msra.mxu0 0
  %712 = vmatprep.subr.bf16.mxu0 0
  %713 = vmatpush1.bf16.msra.mxu0 0
  %714 = vmatprep.subr.bf16.mxu0 0
  %715 = vmatpush1.bf16.msra.mxu0 0
  %716 = vmatprep.subr.bf16.mxu0 0
  %717 = vmatpush1.bf16.msra.mxu0 0
  %718 = vmatprep.subr.bf16.mxu0 0
  %719 = vmatpush1.bf16.msra.mxu0 0
  %720 = vmatprep.mubr.bf16.mxu0 0
  %721 = vmatmul.mubr.bf16.gmra.mrb[0].mxu0 0
  %v722 = vpop.f32.mrb[0].mxu0
  %v723 = vadd.f32 0.0, %v722
  %v724 = vpop.f32.mrb[0].mxu0
  %v725 = vadd.f32 0.0, %v724
  %v726 = vpop.f32.mrb[0].mxu0
  %v727 = vpop.f32.mrb[0].mxu0
  %728 = vdwg.mxu0
  %v729 = vadd.f32 %v451, %v682
  %v730 = vadd.f32 %v452, %v684
  %v731 = vadd.f32 %v453, %v723
  %v732 = vadd.f32 %v454, %v725
  %v733 = vxor.u32 %v729, 2147483648
  %v734 = vxor.u32 %v730, 2147483648
  %v735 = vxor.u32 %v731, 2147483648
  %v736 = vmul.f32 %v733, 1.442695
  %v737 = vpow.pop %v736
  %v738 = vmul.f32 %v734, 1.442695
  %v739 = vpow.pop %v738
  %v740 = vmul.f32 %v735, 1.442695
  %v741 = vpow.pop %v740
  %v742 = vadd.f32 %v737, 1.0
  %v743 = vadd.f32 %v739, 1.0
  %v744 = vadd.f32 %v741, 1.0
  %v745 = vrcp.pop %v742
  %v746 = vmul.f32 1.0, %v745
  %v747 = vrcp.pop %v743
  %v748 = vmul.f32 1.0, %v747
  %v749 = vrcp.pop %v744
  %v750 = vmul.f32 1.0, %v749
  %v751 = vtanh.pop %v732
  %v752 = vmul.f32 %v748, 0.0
  %v753 = vmul.f32 %v746, %v751
  %v754 = vadd.f32 %v752, %v753
  %v755 = vtanh.pop %v754
  %v756 = vmul.f32 %v750, %v755
  %v757 = vpack.c.bf16 %v756, %v756
  %s758 = smul.u32 1, 4
  %s759 = smul.addr %s758, 8
  %s760 = scalar_lea.vmem [#allocation2], %s759
  %v761 = vld [vmem:[%s760] sm:$0xff]
  %v762 = vld [vmem:[%s760 + $0x8] sm:$0xff]
  %v763 = vld [vmem:[%s760 + $0x10] sm:$0xff]
  %v764 = vld [vmem:[%s760 + $0x18] sm:$0xff]
  %765 = vmatprep.subr.bf16.mxu0 %v584
  %766 = vmatpush1.bf16.msra.mxu0 %v583
  %767 = vmatprep.subr.bf16.mxu0 %v588
  %768 = vmatpush1.bf16.msra.mxu0 %v587
  %769 = vmatprep.subr.bf16.mxu0 %v592
  %770 = vmatpush1.bf16.msra.mxu0 %v591
  %771 = vmatprep.subr.bf16.mxu0 %v596
  %772 = vmatpush1.bf16.msra.mxu0 %v595
  %773 = vmatprep.subr.bf16.mxu0 %v600
  %774 = vmatpush1.bf16.msra.mxu0 %v599
  %775 = vmatprep.subr.bf16.mxu0 %v604
  %776 = vmatpush1.bf16.msra.mxu0 %v603
  %777 = vmatprep.subr.bf16.mxu0 %v608
  %778 = vmatpush1.bf16.msra.mxu0 %v607
  %779 = vmatprep.subr.bf16.mxu0 %v612
  %780 = vmatpush1.bf16.msra.mxu0 %v611
  %781 = vmatprep.subr.bf16.mxu0 0
  %782 = vmatpush1.bf16.msra.mxu0 0
  %783 = vmatprep.subr.bf16.mxu0 0
  %784 = vmatpush1.bf16.msra.mxu0 0
  %785 = vmatprep.subr.bf16.mxu0 0
  %786 = vmatpush1.bf16.msra.mxu0 0
  %787 = vmatprep.subr.bf16.mxu0 0
  %788 = vmatpush1.bf16.msra.mxu0 0
  %789 = vmatprep.subr.bf16.mxu0 0
  %790 = vmatpush1.bf16.msra.mxu0 0
  %791 = vmatprep.subr.bf16.mxu0 0
  %792 = vmatpush1.bf16.msra.mxu0 0
  %793 = vmatprep.subr.bf16.mxu0 0
  %794 = vmatpush1.bf16.msra.mxu0 0
  %795 = vmatprep.subr.bf16.mxu0 0
  %796 = vmatpush1.bf16.msra.mxu0 0
  %797 = vmatprep.mubr.bf16.mxu0 0
  %798 = vmatmul.mubr.bf16.gmra.mrb[0].mxu0 %v757
  %v799 = vpop.f32.mrb[0].mxu0
  %v800 = vadd.f32 0.0, %v799
  %v801 = vpop.f32.mrb[0].mxu0
  %v802 = vadd.f32 0.0, %v801
  %v803 = vpop.f32.mrb[0].mxu0
  %v804 = vpop.f32.mrb[0].mxu0
  %805 = vdwg.mxu0
  %806 = vmatprep.subr.bf16.mxu0 %v586
  %807 = vmatpush1.bf16.msra.mxu0 %v585
  %808 = vmatprep.subr.bf16.mxu0 %v590
  %809 = vmatpush1.bf16.msra.mxu0 %v589
  %810 = vmatprep.subr.bf16.mxu0 %v594
  %811 = vmatpush1.bf16.msra.mxu0 %v593
  %812 = vmatprep.subr.bf16.mxu0 %v598
  %813 = vmatpush1.bf16.msra.mxu0 %v597
  %814 = vmatprep.subr.bf16.mxu0 %v602
  %815 = vmatpush1.bf16.msra.mxu0 %v601
  %816 = vmatprep.subr.bf16.mxu0 %v606
  %817 = vmatpush1.bf16.msra.mxu0 %v605
  %818 = vmatprep.subr.bf16.mxu0 %v610
  %819 = vmatpush1.bf16.msra.mxu0 %v609
  %820 = vmatprep.subr.bf16.mxu0 %v614
  %821 = vmatpush1.bf16.msra.mxu0 %v613
  %822 = vmatprep.subr.bf16.mxu0 0
  %823 = vmatpush1.bf16.msra.mxu0 0
  %824 = vmatprep.subr.bf16.mxu0 0
  %825 = vmatpush1.bf16.msra.mxu0 0
  %826 = vmatprep.subr.bf16.mxu0 0
  %827 = vmatpush1.bf16.msra.mxu0 0
  %828 = vmatprep.subr.bf16.mxu0 0
  %829 = vmatpush1.bf16.msra.mxu0 0
  %830 = vmatprep.subr.bf16.mxu0 0
  %831 = vmatpush1.bf16.msra.mxu0 0
  %832 = vmatprep.subr.bf16.mxu0 0
  %833 = vmatpush1.bf16.msra.mxu0 0
  %834 = vmatprep.subr.bf16.mxu0 0
  %835 = vmatpush1.bf16.msra.mxu0 0
  %836 = vmatprep.subr.bf16.mxu0 0
  %837 = vmatpush1.bf16.msra.mxu0 0
  %838 = vmatprep.mubr.bf16.mxu0 0
  %839 = vmatmul.mubr.bf16.gmra.mrb[0].mxu0 %v757
  %v840 = vpop.f32.mrb[0].mxu0
  %v841 = vadd.f32 0.0, %v840
  %v842 = vpop.f32.mrb[0].mxu0
  %v843 = vadd.f32 0.0, %v842
  %v844 = vpop.f32.mrb[0].mxu0
  %v845 = vpop.f32.mrb[0].mxu0
  %846 = vdwg.mxu0
  %v847 = vadd.f32 %v761, %v800
  %v848 = vadd.f32 %v762, %v802
  %v849 = vadd.f32 %v763, %v841
  %v850 = vadd.f32 %v764, %v843
  %v851 = vxor.u32 %v847, 2147483648
  %v852 = vxor.u32 %v848, 2147483648
  %v853 = vxor.u32 %v849, 2147483648
  %v854 = vmul.f32 %v851, 1.442695
  %v855 = vpow.pop %v854
  %v856 = vmul.f32 %v852, 1.442695
  %v857 = vpow.pop %v856
  %v858 = vmul.f32 %v853, 1.442695
  %v859 = vpow.pop %v858
  %v860 = vadd.f32 %v855, 1.0
  %v861 = vadd.f32 %v857, 1.0
  %v862 = vadd.f32 %v859, 1.0
  %v863 = vrcp.pop %v860
  %v864 = vmul.f32 1.0, %v863
  %v865 = vrcp.pop %v861
  %v866 = vmul.f32 1.0, %v865
  %v867 = vrcp.pop %v862
  %v868 = vmul.f32 1.0, %v867
  %v869 = vtanh.pop %v850
  %v870 = vmul.f32 %v866, %v754
  %v871 = vmul.f32 %v864, %v869
  %v872 = vadd.f32 %v870, %v871
  %v873 = vtanh.pop %v872
  %v874 = vmul.f32 %v868, %v873
  %v875 = vpack.c.bf16 %v874, %v874
  %s876 = smul.u32 2, 4
  %s877 = smul.addr %s876, 8
  %s878 = scalar_lea.vmem [#allocation2], %s877
  %v879 = vld [vmem:[%s878] sm:$0xff]
  %v880 = vld [vmem:[%s878 + $0x8] sm:$0xff]
  %v881 = vld [vmem:[%s878 + $0x10] sm:$0xff]
  %v882 = vld [vmem:[%s878 + $0x18] sm:$0xff]
  %883 = vmatprep.subr.bf16.mxu0 %v584
  %884 = vmatpush1.bf16.msra.mxu0 %v583
  %885 = vmatprep.subr.bf16.mxu0 %v588
  %886 = vmatpush1.bf16.msra.mxu0 %v587
  %887 = vmatprep.subr.bf16.mxu0 %v592
  %888 = vmatpush1.bf16.msra.mxu0 %v591
  %889 = vmatprep.subr.bf16.mxu0 %v596
  %890 = vmatpush1.bf16.msra.mxu0 %v595
  %891 = vmatprep.subr.bf16.mxu0 %v600
  %892 = vmatpush1.bf16.msra.mxu0 %v599
  %893 = vmatprep.subr.bf16.mxu0 %v604
  %894 = vmatpush1.bf16.msra.mxu0 %v603
  %895 = vmatprep.subr.bf16.mxu0 %v608
  %896 = vmatpush1.bf16.msra.mxu0 %v607
  %897 = vmatprep.subr.bf16.mxu0 %v612
  %898 = vmatpush1.bf16.msra.mxu0 %v611
  %899 = vmatprep.subr.bf16.mxu0 0
  %900 = vmatpush1.bf16.msra.mxu0 0
  %901 = vmatprep.subr.bf16.mxu0 0
  %902 = vmatpush1.bf16.msra.mxu0 0
  %903 = vmatprep.subr.bf16.mxu0 0
  %904 = vmatpush1.bf16.msra.mxu0 0
  %905 = vmatprep.subr.bf16.mxu0 0
  %906 = vmatpush1.bf16.msra.mxu0 0
  %907 = vmatprep.subr.bf16.mxu0 0
  %908 = vmatpush1.bf16.msra.mxu0 0
  %909 = vmatprep.subr.bf16.mxu0 0
  %910 = vmatpush1.bf16.msra.mxu0 0
  %911 = vmatprep.subr.bf16.mxu0 0
  %912 = vmatpush1.bf16.msra.mxu0 0
  %913 = vmatprep.subr.bf16.mxu0 0
  %914 = vmatpush1.bf16.msra.mxu0 0
  %915 = vmatprep.mubr.bf16.mxu0 0
  %916 = vmatmul.mubr.bf16.gmra.mrb[0].mxu0 %v875
  %v917 = vpop.f32.mrb[0].mxu0
  %v918 = vadd.f32 0.0, %v917
  %v919 = vpop.f32.mrb[0].mxu0
  %v920 = vadd.f32 0.0, %v919
  %v921 = vpop.f32.mrb[0].mxu0
  %v922 = vpop.f32.mrb[0].mxu0
  %923 = vdwg.mxu0
  %924 = vmatprep.subr.bf16.mxu0 %v586
  %925 = vmatpush1.bf16.msra.mxu0 %v585
  %926 = vmatprep.subr.bf16.mxu0 %v590
  %927 = vmatpush1.bf16.msra.mxu0 %v589
  %928 = vmatprep.subr.bf16.mxu0 %v594
  %929 = vmatpush1.bf16.msra.mxu0 %v593
  %930 = vmatprep.subr.bf16.mxu0 %v598
  %931 = vmatpush1.bf16.msra.mxu0 %v597
  %932 = vmatprep.subr.bf16.mxu0 %v602
  %933 = vmatpush1.bf16.msra.mxu0 %v601
  %934 = vmatprep.subr.bf16.mxu0 %v606
  %935 = vmatpush1.bf16.msra.mxu0 %v605
  %936 = vmatprep.subr.bf16.mxu0 %v610
  %937 = vmatpush1.bf16.msra.mxu0 %v609
  %938 = vmatprep.subr.bf16.mxu0 %v614
  %939 = vmatpush1.bf16.msra.mxu0 %v613
  %940 = vmatprep.subr.bf16.mxu0 0
  %941 = vmatpush1.bf16.msra.mxu0 0
  %942 = vmatprep.subr.bf16.mxu0 0
  %943 = vmatpush1.bf16.msra.mxu0 0
  %944 = vmatprep.subr.bf16.mxu0 0
  %945 = vmatpush1.bf16.msra.mxu0 0
  %946 = vmatprep.subr.bf16.mxu0 0
  %947 = vmatpush1.bf16.msra.mxu0 0
  %948 = vmatprep.subr.bf16.mxu0 0
  %949 = vmatpush1.bf16.msra.mxu0 0
  %950 = vmatprep.subr.bf16.mxu0 0
  %951 = vmatpush1.bf16.msra.mxu0 0
  %952 = vmatprep.subr.bf16.mxu0 0
  %953 = vmatpush1.bf16.msra.mxu0 0
  %954 = vmatprep.subr.bf16.mxu0 0
  %955 = vmatpush1.bf16.msra.mxu0 0
  %956 = vmatprep.mubr.bf16.mxu0 0
  %957 = vmatmul.mubr.bf16.gmra.mrb[0].mxu0 %v875
  %v958 = vpop.f32.mrb[0].mxu0
  %v959 = vadd.f32 0.0, %v958
  %v960 = vpop.f32.mrb[0].mxu0
  %v961 = vadd.f32 0.0, %v960
  %v962 = vpop.f32.mrb[0].mxu0
  %v963 = vpop.f32.mrb[0].mxu0
  %964 = vdwg.mxu0
  %v965 = vadd.f32 %v879, %v918
  %v966 = vadd.f32 %v880, %v920
  %v967 = vadd.f32 %v881, %v959
  %v968 = vadd.f32 %v882, %v961
  %v969 = vxor.u32 %v965, 2147483648
  %v970 = vxor.u32 %v966, 2147483648
  %v971 = vxor.u32 %v967, 2147483648
  %v972 = vmul.f32 %v969, 1.442695
  %v973 = vpow.pop %v972
  %v974 = vmul.f32 %v970, 1.442695
  %v975 = vpow.pop %v974
  %v976 = vmul.f32 %v971, 1.442695
  %v977 = vpow.pop %v976
  %v978 = vadd.f32 %v973, 1.0
  %v979 = vadd.f32 %v975, 1.0
  %v980 = vadd.f32 %v977, 1.0
  %v981 = vrcp.pop %v978
  %v982 = vmul.f32 1.0, %v981
  %v983 = vrcp.pop %v979
  %v984 = vmul.f32 1.0, %v983
  %v985 = vrcp.pop %v980
  %v986 = vmul.f32 1.0, %v985
  %v987 = vtanh.pop %v968
  %v988 = vmul.f32 %v984, %v872
  %v989 = vmul.f32 %v982, %v987
  %v990 = vadd.f32 %v988, %v989
  %v991 = vtanh.pop %v990
  %v992 = vmul.f32 %v986, %v991
  %v993 = vpack.c.bf16 %v992, %v992
  %s994 = smul.u32 3, 4
  %s995 = smul.addr %s994, 8
  %s996 = scalar_lea.vmem [#allocation2], %s995
  %v997 = vld [vmem:[%s996] sm:$0xff]
  %v998 = vld [vmem:[%s996 + $0x8] sm:$0xff]
  %v999 = vld [vmem:[%s996 + $0x10] sm:$0xff]
  %v1000 = vld [vmem:[%s996 + $0x18] sm:$0xff]
  %1001 = vmatprep.subr.bf16.mxu0 %v584
  %1002 = vmatpush1.bf16.msra.mxu0 %v583
  %1003 = vmatprep.subr.bf16.mxu0 %v588
  %1004 = vmatpush1.bf16.msra.mxu0 %v587
  %1005 = vmatprep.subr.bf16.mxu0 %v592
  %1006 = vmatpush1.bf16.msra.mxu0 %v591
  %1007 = vmatprep.subr.bf16.mxu0 %v596
  %1008 = vmatpush1.bf16.msra.mxu0 %v595
  %1009 = vmatprep.subr.bf16.mxu0 %v600
  %1010 = vmatpush1.bf16.msra.mxu0 %v599
  %1011 = vmatprep.subr.bf16.mxu0 %v604
  %1012 = vmatpush1.bf16.msra.mxu0 %v603
  %1013 = vmatprep.subr.bf16.mxu0 %v608
  %1014 = vmatpush1.bf16.msra.mxu0 %v607
  %1015 = vmatprep.subr.bf16.mxu0 %v612
  %1016 = vmatpush1.bf16.msra.mxu0 %v611
  %1017 = vmatprep.subr.bf16.mxu0 0
  %1018 = vmatpush1.bf16.msra.mxu0 0
  %1019 = vmatprep.subr.bf16.mxu0 0
  %1020 = vmatpush1.bf16.msra.mxu0 0
  %1021 = vmatprep.subr.bf16.mxu0 0
  %1022 = vmatpush1.bf16.msra.mxu0 0
  %1023 = vmatprep.subr.bf16.mxu0 0
  %1024 = vmatpush1.bf16.msra.mxu0 0
  %1025 = vmatprep.subr.bf16.mxu0 0
  %1026 = vmatpush1.bf16.msra.mxu0 0
  %1027 = vmatprep.subr.bf16.mxu0 0
  %1028 = vmatpush1.bf16.msra.mxu0 0
  %1029 = vmatprep.subr.bf16.mxu0 0
  %1030 = vmatpush1.bf16.msra.mxu0 0
  %1031 = vmatprep.subr.bf16.mxu0 0
  %1032 = vmatpush1.bf16.msra.mxu0 0
  %1033 = vmatprep.mubr.bf16.mxu0 0
  %1034 = vmatmul.mubr.bf16.gmra.mrb[0].mxu0 %v993
  %v1035 = vpop.f32.mrb[0].mxu0
  %v1036 = vadd.f32 0.0, %v1035
  %v1037 = vpop.f32.mrb[0].mxu0
  %v1038 = vadd.f32 0.0, %v1037
  %v1039 = vpop.f32.mrb[0].mxu0
  %v1040 = vpop.f32.mrb[0].mxu0
  %1041 = vdwg.mxu0
  %1042 = vmatprep.subr.bf16.mxu0 %v586
  %1043 = vmatpush1.bf16.msra.mxu0 %v585
  %1044 = vmatprep.subr.bf16.mxu0 %v590
  %1045 = vmatpush1.bf16.msra.mxu0 %v589
  %1046 = vmatprep.subr.bf16.mxu0 %v594
  %1047 = vmatpush1.bf16.msra.mxu0 %v593
  %1048 = vmatprep.subr.bf16.mxu0 %v598
  %1049 = vmatpush1.bf16.msra.mxu0 %v597
  %1050 = vmatprep.subr.bf16.mxu0 %v602
  %1051 = vmatpush1.bf16.msra.mxu0 %v601
  %1052 = vmatprep.subr.bf16.mxu0 %v606
  %1053 = vmatpush1.bf16.msra.mxu0 %v605
  %1054 = vmatprep.subr.bf16.mxu0 %v610
  %1055 = vmatpush1.bf16.msra.mxu0 %v609
  %1056 = vmatprep.subr.bf16.mxu0 %v614
  %1057 = vmatpush1.bf16.msra.mxu0 %v613
  %1058 = vmatprep.subr.bf16.mxu0 0
  %1059 = vmatpush1.bf16.msra.mxu0 0
  %1060 = vmatprep.subr.bf16.mxu0 0
  %1061 = vmatpush1.bf16.msra.mxu0 0
  %1062 = vmatprep.subr.bf16.mxu0 0
  %1063 = vmatpush1.bf16.msra.mxu0 0
  %1064 = vmatprep.subr.bf16.mxu0 0
  %1065 = vmatpush1.bf16.msra.mxu0 0
  %1066 = vmatprep.subr.bf16.mxu0 0
  %1067 = vmatpush1.bf16.msra.mxu0 0
  %1068 = vmatprep.subr.bf16.mxu0 0
  %1069 = vmatpush1.bf16.msra.mxu0 0
  %1070 = vmatprep.subr.bf16.mxu0 0
  %1071 = vmatpush1.bf16.msra.mxu0 0
  %1072 = vmatprep.subr.bf16.mxu0 0
  %1073 = vmatpush1.bf16.msra.mxu0 0
  %1074 = vmatprep.mubr.bf16.mxu0 0
  %1075 = vmatmul.mubr.bf16.gmra.mrb[0].mxu0 %v993
  %v1076 = vpop.f32.mrb[0].mxu0
  %v1077 = vadd.f32 0.0, %v1076
  %v1078 = vpop.f32.mrb[0].mxu0
  %v1079 = vadd.f32 0.0, %v1078
  %v1080 = vpop.f32.mrb[0].mxu0
  %v1081 = vpop.f32.mrb[0].mxu0
  %1082 = vdwg.mxu0
  %v1083 = vadd.f32 %v997, %v1036
  %v1084 = vadd.f32 %v998, %v1038
  %v1085 = vadd.f32 %v999, %v1077
  %v1086 = vadd.f32 %v1000, %v1079
  %v1087 = vxor.u32 %v1083, 2147483648
  %v1088 = vxor.u32 %v1084, 2147483648
  %v1089 = vxor.u32 %v1085, 2147483648
  %v1090 = vmul.f32 %v1087, 1.442695
  %v1091 = vpow.pop %v1090
  %v1092 = vmul.f32 %v1088, 1.442695
  %v1093 = vpow.pop %v1092
  %v1094 = vmul.f32 %v1089, 1.442695
  %v1095 = vpow.pop %v1094
  %v1096 = vadd.f32 %v1091, 1.0
  %v1097 = vadd.f32 %v1093, 1.0
  %v1098 = vadd.f32 %v1095, 1.0
  %v1099 = vrcp.pop %v1096
  %v1100 = vmul.f32 1.0, %v1099
  %v1101 = vrcp.pop %v1097
  %v1102 = vmul.f32 1.0, %v1101
  %v1103 = vrcp.pop %v1098
  %v1104 = vmul.f32 1.0, %v1103
  %v1105 = vtanh.pop %v1086
  %v1106 = vmul.f32 %v1102, %v990
  %v1107 = vmul.f32 %v1100, %v1105
  %v1108 = vadd.f32 %v1106, %v1107
  %v1109 = vtanh.pop %v1108
  %v1110 = vmul.f32 %v1104, %v1109
  %v1111 = vpack.c.bf16 %v1110, %v1110
  %s1112 = smul.u32 4, 4
  %s1113 = smul.addr %s1112, 8
  %s1114 = scalar_lea.vmem [#allocation2], %s1113
  %v1115 = vld [vmem:[%s1114] sm:$0xff]
  %v1116 = vld [vmem:[%s1114 + $0x8] sm:$0xff]
  %v1117 = vld [vmem:[%s1114 + $0x10] sm:$0xff]
  %v1118 = vld [vmem:[%s1114 + $0x18] sm:$0xff]
  %1119 = vmatprep.subr.bf16.mxu0 %v584
  %1120 = vmatpush1.bf16.msra.mxu0 %v583
  %1121 = vmatprep.subr.bf16.mxu0 %v588
  %1122 = vmatpush1.bf16.msra.mxu0 %v587
  %1123 = vmatprep.subr.bf16.mxu0 %v592
  %1124 = vmatpush1.bf16.msra.mxu0 %v591
  %1125 = vmatprep.subr.bf16.mxu0 %v596
  %1126 = vmatpush1.bf16.msra.mxu0 %v595
  %1127 = vmatprep.subr.bf16.mxu0 %v600
  %1128 = vmatpush1.bf16.msra.mxu0 %v599
  %1129 = vmatprep.subr.bf16.mxu0 %v604
  %1130 = vmatpush1.bf16.msra.mxu0 %v603
  %1131 = vmatprep.subr.bf16.mxu0 %v608
  %1132 = vmatpush1.bf16.msra.mxu0 %v607
  %1133 = vmatprep.subr.bf16.mxu0 %v612
  %1134 = vmatpush1.bf16.msra.mxu0 %v611
  %1135 = vmatprep.subr.bf16.mxu0 0
  %1136 = vmatpush1.bf16.msra.mxu0 0
  %1137 = vmatprep.subr.bf16.mxu0 0
  %1138 = vmatpush1.bf16.msra.mxu0 0
  %1139 = vmatprep.subr.bf16.mxu0 0
  %1140 = vmatpush1.bf16.msra.mxu0 0
  %1141 = vmatprep.subr.bf16.mxu0 0
  %1142 = vmatpush1.bf16.msra.mxu0 0
  %1143 = vmatprep.subr.bf16.mxu0 0
  %1144 = vmatpush1.bf16.msra.mxu0 0
  %1145 = vmatprep.subr.bf16.mxu0 0
  %1146 = vmatpush1.bf16.msra.mxu0 0
  %1147 = vmatprep.subr.bf16.mxu0 0
  %1148 = vmatpush1.bf16.msra.mxu0 0
  %1149 = vmatprep.subr.bf16.mxu0 0
  %1150 = vmatpush1.bf16.msra.mxu0 0
  %1151 = vmatprep.mubr.bf16.mxu0 0
  %1152 = vmatmul.mubr.bf16.gmra.mrb[0].mxu0 %v1111
  %v1153 = vpop.f32.mrb[0].mxu0
  %v1154 = vadd.f32 0.0, %v1153
  %v1155 = vpop.f32.mrb[0].mxu0
  %v1156 = vadd.f32 0.0, %v1155
  %v1157 = vpop.f32.mrb[0].mxu0
  %v1158 = vpop.f32.mrb[0].mxu0
  %1159 = vdwg.mxu0
  %1160 = vmatprep.subr.bf16.mxu0 %v586
  %1161 = vmatpush1.bf16.msra.mxu0 %v585
  %1162 = vmatprep.subr.bf16.mxu0 %v590
  %1163 = vmatpush1.bf16.msra.mxu0 %v589
  %1164 = vmatprep.subr.bf16.mxu0 %v594
  %1165 = vmatpush1.bf16.msra.mxu0 %v593
  %1166 = vmatprep.subr.bf16.mxu0 %v598
  %1167 = vmatpush1.bf16.msra.mxu0 %v597
  %1168 = vmatprep.subr.bf16.mxu0 %v602
  %1169 = vmatpush1.bf16.msra.mxu0 %v601
  %1170 = vmatprep.subr.bf16.mxu0 %v606
  %1171 = vmatpush1.bf16.msra.mxu0 %v605
  %1172 = vmatprep.subr.bf16.mxu0 %v610
  %1173 = vmatpush1.bf16.msra.mxu0 %v609
  %1174 = vmatprep.subr.bf16.mxu0 %v614
  %1175 = vmatpush1.bf16.msra.mxu0 %v613
  %1176 = vmatprep.subr.bf16.mxu0 0
  %1177 = vmatpush1.bf16.msra.mxu0 0
  %1178 = vmatprep.subr.bf16.mxu0 0
  %1179 = vmatpush1.bf16.msra.mxu0 0
  %1180 = vmatprep.subr.bf16.mxu0 0
  %1181 = vmatpush1.bf16.msra.mxu0 0
  %1182 = vmatprep.subr.bf16.mxu0 0
  %1183 = vmatpush1.bf16.msra.mxu0 0
  %1184 = vmatprep.subr.bf16.mxu0 0
  %1185 = vmatpush1.bf16.msra.mxu0 0
  %1186 = vmatprep.subr.bf16.mxu0 0
  %1187 = vmatpush1.bf16.msra.mxu0 0
  %1188 = vmatprep.subr.bf16.mxu0 0
  %1189 = vmatpush1.bf16.msra.mxu0 0
  %1190 = vmatprep.subr.bf16.mxu0 0
  %1191 = vmatpush1.bf16.msra.mxu0 0
  %1192 = vmatprep.mubr.bf16.mxu0 0
  %1193 = vmatmul.mubr.bf16.gmra.mrb[0].mxu0 %v1111
  %v1194 = vpop.f32.mrb[0].mxu0
  %v1195 = vadd.f32 0.0, %v1194
  %v1196 = vpop.f32.mrb[0].mxu0
  %v1197 = vadd.f32 0.0, %v1196
  %v1198 = vpop.f32.mrb[0].mxu0
  %v1199 = vpop.f32.mrb[0].mxu0
  %1200 = vdwg.mxu0
  %v1201 = vadd.f32 %v1115, %v1154
  %v1202 = vadd.f32 %v1116, %v1156
  %v1203 = vadd.f32 %v1117, %v1195
  %v1204 = vadd.f32 %v1118, %v1197
  %v1205 = vxor.u32 %v1201, 2147483648
  %v1206 = vxor.u32 %v1202, 2147483648
  %v1207 = vxor.u32 %v1203, 2147483648
  %v1208 = vmul.f32 %v1205, 1.442695
  %v1209 = vpow.pop %v1208
  %v1210 = vmul.f32 %v1206, 1.442695
  %v1211 = vpow.pop %v1210
  %v1212 = vmul.f32 %v1207, 1.442695
  %v1213 = vpow.pop %v1212
  %v1214 = vadd.f32 %v1209, 1.0
  %v1215 = vadd.f32 %v1211, 1.0
  %v1216 = vadd.f32 %v1213, 1.0
  %v1217 = vrcp.pop %v1214
  %v1218 = vmul.f32 1.0, %v1217
  %v1219 = vrcp.pop %v1215
  %v1220 = vmul.f32 1.0, %v1219
  %v1221 = vrcp.pop %v1216
  %v1222 = vmul.f32 1.0, %v1221
  %v1223 = vtanh.pop %v1204
  %v1224 = vmul.f32 %v1220, %v1108
  %v1225 = vmul.f32 %v1218, %v1223
  %v1226 = vadd.f32 %v1224, %v1225
  %v1227 = vtanh.pop %v1226
  %v1228 = vmul.f32 %v1222, %v1227
  %v1229 = vpack.c.bf16 %v1228, %v1228
  %s1230 = smul.u32 5, 4
  %s1231 = smul.addr %s1230, 8
  %s1232 = scalar_lea.vmem [#allocation2], %s1231
  %v1233 = vld [vmem:[%s1232] sm:$0xff]
  %v1234 = vld [vmem:[%s1232 + $0x8] sm:$0xff]
  %v1235 = vld [vmem:[%s1232 + $0x10] sm:$0xff]
  %v1236 = vld [vmem:[%s1232 + $0x18] sm:$0xff]
  %1237 = vmatprep.subr.bf16.mxu0 %v584
  %1238 = vmatpush1.bf16.msra.mxu0 %v583
  %1239 = vmatprep.subr.bf16.mxu0 %v588
  %1240 = vmatpush1.bf16.msra.mxu0 %v587
  %1241 = vmatprep.subr.bf16.mxu0 %v592
  %1242 = vmatpush1.bf16.msra.mxu0 %v591
  %1243 = vmatprep.subr.bf16.mxu0 %v596
  %1244 = vmatpush1.bf16.msra.mxu0 %v595
  %1245 = vmatprep.subr.bf16.mxu0 %v600
  %1246 = vmatpush1.bf16.msra.mxu0 %v599
  %1247 = vmatprep.subr.bf16.mxu0 %v604
  %1248 = vmatpush1.bf16.msra.mxu0 %v603
  %1249 = vmatprep.subr.bf16.mxu0 %v608
  %1250 = vmatpush1.bf16.msra.mxu0 %v607
  %1251 = vmatprep.subr.bf16.mxu0 %v612
  %1252 = vmatpush1.bf16.msra.mxu0 %v611
  %1253 = vmatprep.subr.bf16.mxu0 0
  %1254 = vmatpush1.bf16.msra.mxu0 0
  %1255 = vmatprep.subr.bf16.mxu0 0
  %1256 = vmatpush1.bf16.msra.mxu0 0
  %1257 = vmatprep.subr.bf16.mxu0 0
  %1258 = vmatpush1.bf16.msra.mxu0 0
  %1259 = vmatprep.subr.bf16.mxu0 0
  %1260 = vmatpush1.bf16.msra.mxu0 0
  %1261 = vmatprep.subr.bf16.mxu0 0
  %1262 = vmatpush1.bf16.msra.mxu0 0
  %1263 = vmatprep.subr.bf16.mxu0 0
  %1264 = vmatpush1.bf16.msra.mxu0 0
  %1265 = vmatprep.subr.bf16.mxu0 0
  %1266 = vmatpush1.bf16.msra.mxu0 0
  %1267 = vmatprep.subr.bf16.mxu0 0
  %1268 = vmatpush1.bf16.msra.mxu0 0
  %1269 = vmatprep.mubr.bf16.mxu0 0
  %1270 = vmatmul.mubr.bf16.gmra.mrb[0].mxu0 %v1229
  %v1271 = vpop.f32.mrb[0].mxu0
  %v1272 = vadd.f32 0.0, %v1271
  %v1273 = vpop.f32.mrb[0].mxu0
  %v1274 = vadd.f32 0.0, %v1273
  %v1275 = vpop.f32.mrb[0].mxu0
  %v1276 = vpop.f32.mrb[0].mxu0
  %1277 = vdwg.mxu0
  %1278 = vmatprep.subr.bf16.mxu0 %v586
  %1279 = vmatpush1.bf16.msra.mxu0 %v585
  %1280 = vmatprep.subr.bf16.mxu0 %v590
  %1281 = vmatpush1.bf16.msra.mxu0 %v589
  %1282 = vmatprep.subr.bf16.mxu0 %v594
  %1283 = vmatpush1.bf16.msra.mxu0 %v593
  %1284 = vmatprep.subr.bf16.mxu0 %v598
  %1285 = vmatpush1.bf16.msra.mxu0 %v597
  %1286 = vmatprep.subr.bf16.mxu0 %v602
  %1287 = vmatpush1.bf16.msra.mxu0 %v601
  %1288 = vmatprep.subr.bf16.mxu0 %v606
  %1289 = vmatpush1.bf16.msra.mxu0 %v605
  %1290 = vmatprep.subr.bf16.mxu0 %v610
  %1291 = vmatpush1.bf16.msra.mxu0 %v609
  %1292 = vmatprep.subr.bf16.mxu0 %v614
  %1293 = vmatpush1.bf16.msra.mxu0 %v613
  %1294 = vmatprep.subr.bf16.mxu0 0
  %1295 = vmatpush1.bf16.msra.mxu0 0
  %1296 = vmatprep.subr.bf16.mxu0 0
  %1297 = vmatpush1.bf16.msra.mxu0 0
  %1298 = vmatprep.subr.bf16.mxu0 0
  %1299 = vmatpush1.bf16.msra.mxu0 0
  %1300 = vmatprep.subr.bf16.mxu0 0
  %1301 = vmatpush1.bf16.msra.mxu0 0
  %1302 = vmatprep.subr.bf16.mxu0 0
  %1303 = vmatpush1.bf16.msra.mxu0 0
  %1304 = vmatprep.subr.bf16.mxu0 0
  %1305 = vmatpush1.bf16.msra.mxu0 0
  %1306 = vmatprep.subr.bf16.mxu0 0
  %1307 = vmatpush1.bf16.msra.mxu0 0
  %1308 = vmatprep.subr.bf16.mxu0 0
  %1309 = vmatpush1.bf16.msra.mxu0 0
  %1310 = vmatprep.mubr.bf16.mxu0 0
  %1311 = vmatmul.mubr.bf16.gmra.mrb[0].mxu0 %v1229
  %v1312 = vpop.f32.mrb[0].mxu0
  %v1313 = vadd.f32 0.0, %v1312
  %v1314 = vpop.f32.mrb[0].mxu0
  %v1315 = vadd.f32 0.0, %v1314
  %v1316 = vpop.f32.mrb[0].mxu0
  %v1317 = vpop.f32.mrb[0].mxu0
  %1318 = vdwg.mxu0
  %v1319 = vadd.f32 %v1233, %v1272
  %v1320 = vadd.f32 %v1234, %v1274
  %v1321 = vadd.f32 %v1235, %v1313
  %v1322 = vadd.f32 %v1236, %v1315
  %v1323 = vxor.u32 %v1319, 2147483648
  %v1324 = vxor.u32 %v1320, 2147483648
  %v1325 = vxor.u32 %v1321, 2147483648
  %v1326 = vmul.f32 %v1323, 1.442695
  %v1327 = vpow.pop %v1326
  %v1328 = vmul.f32 %v1324, 1.442695
  %v1329 = vpow.pop %v1328
  %v1330 = vmul.f32 %v1325, 1.442695
  %v1331 = vpow.pop %v1330
  %v1332 = vadd.f32 %v1327, 1.0
  %v1333 = vadd.f32 %v1329, 1.0
  %v1334 = vadd.f32 %v1331, 1.0
  %v1335 = vrcp.pop %v1332
  %v1336 = vmul.f32 1.0, %v1335
  %v1337 = vrcp.pop %v1333
  %v1338 = vmul.f32 1.0, %v1337
  %v1339 = vrcp.pop %v1334
  %v1340 = vmul.f32 1.0, %v1339
  %v1341 = vtanh.pop %v1322
  %v1342 = vmul.f32 %v1338, %v1226
  %v1343 = vmul.f32 %v1336, %v1341
  %v1344 = vadd.f32 %v1342, %v1343
  %v1345 = vtanh.pop %v1344
  %v1346 = vmul.f32 %v1340, %v1345
  %v1347 = vpack.c.bf16 %v1346, %v1346
  %s1348 = smul.u32 6, 4
  %s1349 = smul.addr %s1348, 8
  %s1350 = scalar_lea.vmem [#allocation2], %s1349
  %v1351 = vld [vmem:[%s1350] sm:$0xff]
  %v1352 = vld [vmem:[%s1350 + $0x8] sm:$0xff]
  %v1353 = vld [vmem:[%s1350 + $0x10] sm:$0xff]
  %v1354 = vld [vmem:[%s1350 + $0x18] sm:$0xff]
  %1355 = vmatprep.subr.bf16.mxu0 %v584
  %1356 = vmatpush1.bf16.msra.mxu0 %v583
  %1357 = vmatprep.subr.bf16.mxu0 %v588
  %1358 = vmatpush1.bf16.msra.mxu0 %v587
  %1359 = vmatprep.subr.bf16.mxu0 %v592
  %1360 = vmatpush1.bf16.msra.mxu0 %v591
  %1361 = vmatprep.subr.bf16.mxu0 %v596
  %1362 = vmatpush1.bf16.msra.mxu0 %v595
  %1363 = vmatprep.subr.bf16.mxu0 %v600
  %1364 = vmatpush1.bf16.msra.mxu0 %v599
  %1365 = vmatprep.subr.bf16.mxu0 %v604
  %1366 = vmatpush1.bf16.msra.mxu0 %v603
  %1367 = vmatprep.subr.bf16.mxu0 %v608
  %1368 = vmatpush1.bf16.msra.mxu0 %v607
  %1369 = vmatprep.subr.bf16.mxu0 %v612
  %1370 = vmatpush1.bf16.msra.mxu0 %v611
  %1371 = vmatprep.subr.bf16.mxu0 0
  %1372 = vmatpush1.bf16.msra.mxu0 0
  %1373 = vmatprep.subr.bf16.mxu0 0
  %1374 = vmatpush1.bf16.msra.mxu0 0
  %1375 = vmatprep.subr.bf16.mxu0 0
  %1376 = vmatpush1.bf16.msra.mxu0 0
  %1377 = vmatprep.subr.bf16.mxu0 0
  %1378 = vmatpush1.bf16.msra.mxu0 0
  %1379 = vmatprep.subr.bf16.mxu0 0
  %1380 = vmatpush1.bf16.msra.mxu0 0
  %1381 = vmatprep.subr.bf16.mxu0 0
  %1382 = vmatpush1.bf16.msra.mxu0 0
  %1383 = vmatprep.subr.bf16.mxu0 0
  %1384 = vmatpush1.bf16.msra.mxu0 0
  %1385 = vmatprep.subr.bf16.mxu0 0
  %1386 = vmatpush1.bf16.msra.mxu0 0
  %1387 = vmatprep.mubr.bf16.mxu0 0
  %1388 = vmatmul.mubr.bf16.gmra.mrb[0].mxu0 %v1347
  %v1389 = vpop.f32.mrb[0].mxu0
  %v1390 = vadd.f32 0.0, %v1389
  %v1391 = vpop.f32.mrb[0].mxu0
  %v1392 = vadd.f32 0.0, %v1391
  %v1393 = vpop.f32.mrb[0].mxu0
  %v1394 = vpop.f32.mrb[0].mxu0
  %1395 = vdwg.mxu0
  %1396 = vmatprep.subr.bf16.mxu0 %v586
  %1397 = vmatpush1.bf16.msra.mxu0 %v585
  %1398 = vmatprep.subr.bf16.mxu0 %v590
  %1399 = vmatpush1.bf16.msra.mxu0 %v589
  %1400 = vmatprep.subr.bf16.mxu0 %v594
  %1401 = vmatpush1.bf16.msra.mxu0 %v593
  %1402 = vmatprep.subr.bf16.mxu0 %v598
  %1403 = vmatpush1.bf16.msra.mxu0 %v597
  %1404 = vmatprep.subr.bf16.mxu0 %v602
  %1405 = vmatpush1.bf16.msra.mxu0 %v601
  %1406 = vmatprep.subr.bf16.mxu0 %v606
  %1407 = vmatpush1.bf16.msra.mxu0 %v605
  %1408 = vmatprep.subr.bf16.mxu0 %v610
  %1409 = vmatpush1.bf16.msra.mxu0 %v609
  %1410 = vmatprep.subr.bf16.mxu0 %v614
  %1411 = vmatpush1.bf16.msra.mxu0 %v613
  %1412 = vmatprep.subr.bf16.mxu0 0
  %1413 = vmatpush1.bf16.msra.mxu0 0
  %1414 = vmatprep.subr.bf16.mxu0 0
  %1415 = vmatpush1.bf16.msra.mxu0 0
  %1416 = vmatprep.subr.bf16.mxu0 0
  %1417 = vmatpush1.bf16.msra.mxu0 0
  %1418 = vmatprep.subr.bf16.mxu0 0
  %1419 = vmatpush1.bf16.msra.mxu0 0
  %1420 = vmatprep.subr.bf16.mxu0 0
  %1421 = vmatpush1.bf16.msra.mxu0 0
  %1422 = vmatprep.subr.bf16.mxu0 0
  %1423 = vmatpush1.bf16.msra.mxu0 0
  %1424 = vmatprep.subr.bf16.mxu0 0
  %1425 = vmatpush1.bf16.msra.mxu0 0
  %1426 = vmatprep.subr.bf16.mxu0 0
  %1427 = vmatpush1.bf16.msra.mxu0 0
  %1428 = vmatprep.mubr.bf16.mxu0 0
  %1429 = vmatmul.mubr.bf16.gmra.mrb[0].mxu0 %v1347
  %v1430 = vpop.f32.mrb[0].mxu0
  %v1431 = vadd.f32 0.0, %v1430
  %v1432 = vpop.f32.mrb[0].mxu0
  %v1433 = vadd.f32 0.0, %v1432
  %v1434 = vpop.f32.mrb[0].mxu0
  %v1435 = vpop.f32.mrb[0].mxu0
  %1436 = vdwg.mxu0
  %v1437 = vadd.f32 %v1351, %v1390
  %v1438 = vadd.f32 %v1352, %v1392
  %v1439 = vadd.f32 %v1353, %v1431
  %v1440 = vadd.f32 %v1354, %v1433
  %v1441 = vxor.u32 %v1437, 2147483648
  %v1442 = vxor.u32 %v1438, 2147483648
  %v1443 = vxor.u32 %v1439, 2147483648
  %v1444 = vmul.f32 %v1441, 1.442695
  %v1445 = vpow.pop %v1444
  %v1446 = vmul.f32 %v1442, 1.442695
  %v1447 = vpow.pop %v1446
  %v1448 = vmul.f32 %v1443, 1.442695
  %v1449 = vpow.pop %v1448
  %v1450 = vadd.f32 %v1445, 1.0
  %v1451 = vadd.f32 %v1447, 1.0
  %v1452 = vadd.f32 %v1449, 1.0
  %v1453 = vrcp.pop %v1450
  %v1454 = vmul.f32 1.0, %v1453
  %v1455 = vrcp.pop %v1451
  %v1456 = vmul.f32 1.0, %v1455
  %v1457 = vrcp.pop %v1452
  %v1458 = vmul.f32 1.0, %v1457
  %v1459 = vtanh.pop %v1440
  %v1460 = vmul.f32 %v1456, %v1344
  %v1461 = vmul.f32 %v1454, %v1459
  %v1462 = vadd.f32 %v1460, %v1461
  %v1463 = vtanh.pop %v1462
  %v1464 = vmul.f32 %v1458, %v1463
  %v1465 = vpack.c.bf16 %v1464, %v1464
  %s1466 = smul.u32 7, 4
  %s1467 = smul.addr %s1466, 8
  %s1468 = scalar_lea.vmem [#allocation2], %s1467
  %v1469 = vld [vmem:[%s1468] sm:$0xff]
  %v1470 = vld [vmem:[%s1468 + $0x8] sm:$0xff]
  %v1471 = vld [vmem:[%s1468 + $0x10] sm:$0xff]
  %v1472 = vld [vmem:[%s1468 + $0x18] sm:$0xff]
  %1473 = vmatprep.subr.bf16.mxu0 %v584
  %1474 = vmatpush1.bf16.msra.mxu0 %v583
  %1475 = vmatprep.subr.bf16.mxu0 %v588
  %1476 = vmatpush1.bf16.msra.mxu0 %v587
  %1477 = vmatprep.subr.bf16.mxu0 %v592
  %1478 = vmatpush1.bf16.msra.mxu0 %v591
  %1479 = vmatprep.subr.bf16.mxu0 %v596
  %1480 = vmatpush1.bf16.msra.mxu0 %v595
  %1481 = vmatprep.subr.bf16.mxu0 %v600
  %1482 = vmatpush1.bf16.msra.mxu0 %v599
  %1483 = vmatprep.subr.bf16.mxu0 %v604
  %1484 = vmatpush1.bf16.msra.mxu0 %v603
  %1485 = vmatprep.subr.bf16.mxu0 %v608
  %1486 = vmatpush1.bf16.msra.mxu0 %v607
  %1487 = vmatprep.subr.bf16.mxu0 %v612
  %1488 = vmatpush1.bf16.msra.mxu0 %v611
  %1489 = vmatprep.subr.bf16.mxu0 0
  %1490 = vmatpush1.bf16.msra.mxu0 0
  %1491 = vmatprep.subr.bf16.mxu0 0
  %1492 = vmatpush1.bf16.msra.mxu0 0
  %1493 = vmatprep.subr.bf16.mxu0 0
  %1494 = vmatpush1.bf16.msra.mxu0 0
  %1495 = vmatprep.subr.bf16.mxu0 0
  %1496 = vmatpush1.bf16.msra.mxu0 0
  %1497 = vmatprep.subr.bf16.mxu0 0
  %1498 = vmatpush1.bf16.msra.mxu0 0
  %1499 = vmatprep.subr.bf16.mxu0 0
  %1500 = vmatpush1.bf16.msra.mxu0 0
  %1501 = vmatprep.subr.bf16.mxu0 0
  %1502 = vmatpush1.bf16.msra.mxu0 0
  %1503 = vmatprep.subr.bf16.mxu0 0
  %1504 = vmatpush1.bf16.msra.mxu0 0
  %1505 = vmatprep.mubr.bf16.mxu0 0
  %1506 = vmatmul.mubr.bf16.gmra.mrb[0].mxu0 %v1465
  %v1507 = vpop.f32.mrb[0].mxu0
  %v1508 = vadd.f32 0.0, %v1507
  %v1509 = vpop.f32.mrb[0].mxu0
  %v1510 = vadd.f32 0.0, %v1509
  %v1511 = vpop.f32.mrb[0].mxu0
  %v1512 = vpop.f32.mrb[0].mxu0
  %1513 = vdwg.mxu0
  %1514 = vmatprep.subr.bf16.mxu0 %v586
  %1515 = vmatpush1.bf16.msra.mxu0 %v585
  %1516 = vmatprep.subr.bf16.mxu0 %v590
  %1517 = vmatpush1.bf16.msra.mxu0 %v589
  %1518 = vmatprep.subr.bf16.mxu0 %v594
  %1519 = vmatpush1.bf16.msra.mxu0 %v593
  %1520 = vmatprep.subr.bf16.mxu0 %v598
  %1521 = vmatpush1.bf16.msra.mxu0 %v597
  %1522 = vmatprep.subr.bf16.mxu0 %v602
  %1523 = vmatpush1.bf16.msra.mxu0 %v601
  %1524 = vmatprep.subr.bf16.mxu0 %v606
  %1525 = vmatpush1.bf16.msra.mxu0 %v605
  %1526 = vmatprep.subr.bf16.mxu0 %v610
  %1527 = vmatpush1.bf16.msra.mxu0 %v609
  %1528 = vmatprep.subr.bf16.mxu0 %v614
  %1529 = vmatpush1.bf16.msra.mxu0 %v613
  %1530 = vmatprep.subr.bf16.mxu0 0
  %1531 = vmatpush1.bf16.msra.mxu0 0
  %1532 = vmatprep.subr.bf16.mxu0 0
  %1533 = vmatpush1.bf16.msra.mxu0 0
  %1534 = vmatprep.subr.bf16.mxu0 0
  %1535 = vmatpush1.bf16.msra.mxu0 0
  %1536 = vmatprep.subr.bf16.mxu0 0
  %1537 = vmatpush1.bf16.msra.mxu0 0
  %1538 = vmatprep.subr.bf16.mxu0 0
  %1539 = vmatpush1.bf16.msra.mxu0 0
  %1540 = vmatprep.subr.bf16.mxu0 0
  %1541 = vmatpush1.bf16.msra.mxu0 0
  %1542 = vmatprep.subr.bf16.mxu0 0
  %1543 = vmatpush1.bf16.msra.mxu0 0
  %1544 = vmatprep.subr.bf16.mxu0 0
  %1545 = vmatpush1.bf16.msra.mxu0 0
  %1546 = vmatprep.mubr.bf16.mxu0 0
  %1547 = vmatmul.mubr.bf16.gmra.mrb[0].mxu0 %v1465
  %v1548 = vpop.f32.mrb[0].mxu0
  %v1549 = vadd.f32 0.0, %v1548
  %v1550 = vpop.f32.mrb[0].mxu0
  %v1551 = vadd.f32 0.0, %v1550
  %v1552 = vpop.f32.mrb[0].mxu0
  %v1553 = vpop.f32.mrb[0].mxu0
  %1554 = vdwg.mxu0
  %v1555 = vadd.f32 %v1469, %v1508
  %v1556 = vadd.f32 %v1470, %v1510
  %v1557 = vadd.f32 %v1471, %v1549
  %v1558 = vadd.f32 %v1472, %v1551
  %v1559 = vxor.u32 %v1555, 2147483648
  %v1560 = vxor.u32 %v1556, 2147483648
  %v1561 = vxor.u32 %v1557, 2147483648
  %v1562 = vmul.f32 %v1559, 1.442695
  %v1563 = vpow.pop %v1562
  %v1564 = vmul.f32 %v1560, 1.442695
  %v1565 = vpow.pop %v1564
  %v1566 = vmul.f32 %v1561, 1.442695
  %v1567 = vpow.pop %v1566
  %v1568 = vadd.f32 %v1563, 1.0
  %v1569 = vadd.f32 %v1565, 1.0
  %v1570 = vadd.f32 %v1567, 1.0
  %v1571 = vrcp.pop %v1568
  %v1572 = vmul.f32 1.0, %v1571
  %v1573 = vrcp.pop %v1569
  %v1574 = vmul.f32 1.0, %v1573
  %v1575 = vrcp.pop %v1570
  %v1576 = vmul.f32 1.0, %v1575
  %v1577 = vtanh.pop %v1558
  %v1578 = vmul.f32 %v1574, %v1462
  %v1579 = vmul.f32 %v1572, %v1577
  %v1580 = vadd.f32 %v1578, %v1579
  %v1581 = vtanh.pop %v1580
  %v1582 = vmul.f32 %v1576, %v1581
  %v1583 = vpack.c.bf16 %v1582, %v1582
  %v1584 = vld [vmem:[%s4] sm:$0xf]
  %v1585 = vld [vmem:[%s4 + $0x4] sm:$0xf]
  %v1586 = vld [vmem:[%s4 + $0x8] sm:$0xf]
  %v1587 = vld [vmem:[%s4 + $0xc] sm:$0xf]
  %v1588 = vld [vmem:[%s4 + $0x10] sm:$0xf]
  %v1589 = vld [vmem:[%s4 + $0x14] sm:$0xf]
  %v1590 = vld [vmem:[%s4 + $0x18] sm:$0xf]
  %v1591 = vld [vmem:[%s4 + $0x1c] sm:$0xf]
  %v1592 = vld [vmem:[%s4 + $0x20] sm:$0xf]
  %v1593 = vld [vmem:[%s4 + $0x24] sm:$0xf]
  %v1594 = vld [vmem:[%s4 + $0x28] sm:$0xf]
  %v1595 = vld [vmem:[%s4 + $0x2c] sm:$0xf]
  %v1596 = vld [vmem:[%s4 + $0x30] sm:$0xf]
  %v1597 = vld [vmem:[%s4 + $0x34] sm:$0xf]
  %v1598 = vld [vmem:[%s4 + $0x38] sm:$0xf]
  %v1599 = vld [vmem:[%s4 + $0x3c] sm:$0xf]
  %v1600 = vld [vmem:[%s5] sm:$0x1]
  %v1602 = vlaneseq
  %v1603 = vshrl.u32 %v1602, 7
  %v1604 = vsub.s32 0, %v1603
  %v1605 = vrot.slane %v1600, %v1604
  %v1623 = vunpack.c.l.b16 %v1584
  %v1624 = vunpack.c.l.b16 %v1585
  %v1625 = vunpack.c.l.b16 %v1586
  %v1626 = vunpack.c.l.b16 %v1587
  %v1627 = vunpack.c.l.b16 %v1588
  %v1628 = vunpack.c.l.b16 %v1589
  %v1629 = vunpack.c.l.b16 %v1590
  %v1630 = vunpack.c.l.b16 %v1591
  %v1631 = vunpack.c.l.b16 %v1592
  %v1632 = vunpack.c.l.b16 %v1593
  %v1633 = vunpack.c.l.b16 %v1594
  %v1634 = vunpack.c.l.b16 %v1595
  %v1635 = vunpack.c.l.b16 %v1596
  %v1636 = vunpack.c.l.b16 %v1597
  %v1637 = vunpack.c.l.b16 %v1598
  %v1638 = vunpack.c.l.b16 %v1599
  %v1639 = vpack.c.b16 %v1624, %v1623
  %v1640 = vpack.c.b16 %v1626, %v1625
  %v1641 = vpack.c.b16 %v1628, %v1627
  %v1642 = vpack.c.b16 %v1630, %v1629
  %v1643 = vpack.c.b16 %v1632, %v1631
  %v1644 = vpack.c.b16 %v1634, %v1633
  %v1645 = vpack.c.b16 %v1636, %v1635
  %v1646 = vpack.c.b16 %v1638, %v1637
  %1655 = vmatprep.subr.bf16.mxu0 0
  %1656 = vmatpush1.bf16.msra.mxu0 %v1639
  %1657 = vmatprep.subr.bf16.mxu0 0
  %1658 = vmatpush1.bf16.msra.mxu0 %v1640
  %1659 = vmatprep.subr.bf16.mxu0 0
  %1660 = vmatpush1.bf16.msra.mxu0 %v1641
  %1661 = vmatprep.subr.bf16.mxu0 0
  %1662 = vmatpush1.bf16.msra.mxu0 %v1642
  %1663 = vmatprep.subr.bf16.mxu0 0
  %1664 = vmatpush1.bf16.msra.mxu0 %v1643
  %1665 = vmatprep.subr.bf16.mxu0 0
  %1666 = vmatpush1.bf16.msra.mxu0 %v1644
  %1667 = vmatprep.subr.bf16.mxu0 0
  %1668 = vmatpush1.bf16.msra.mxu0 %v1645
  %1669 = vmatprep.subr.bf16.mxu0 0
  %1670 = vmatpush1.bf16.msra.mxu0 %v1646
  %1671 = vmatprep.subr.bf16.mxu0 0
  %1672 = vmatpush1.bf16.msra.mxu0 0
  %1673 = vmatprep.subr.bf16.mxu0 0
  %1674 = vmatpush1.bf16.msra.mxu0 0
  %1675 = vmatprep.subr.bf16.mxu0 0
  %1676 = vmatpush1.bf16.msra.mxu0 0
  %1677 = vmatprep.subr.bf16.mxu0 0
  %1678 = vmatpush1.bf16.msra.mxu0 0
  %1679 = vmatprep.subr.bf16.mxu0 0
  %1680 = vmatpush1.bf16.msra.mxu0 0
  %1681 = vmatprep.subr.bf16.mxu0 0
  %1682 = vmatpush1.bf16.msra.mxu0 0
  %1683 = vmatprep.subr.bf16.mxu0 0
  %1684 = vmatpush1.bf16.msra.mxu0 0
  %1685 = vmatprep.subr.bf16.mxu0 0
  %1686 = vmatpush1.bf16.msra.mxu0 0
  %1687 = vmatprep.mubr.bf16.mxu0 0
  %1688 = vmatmul.mubr.bf16.gmra.mrb[0].mxu0 %v1583
  %v1689 = vpop.f32.mrb[0].mxu0
  %v1690 = vadd.f32 %v1605, %v1689
  %v1691 = vpop.f32.mrb[0].mxu0
  %v1692 = vpop.f32.mrb[0].mxu0
  %v1693 = vpop.f32.mrb[0].mxu0
  %1694 = vdwg.mxu0
  %1695 = vmax.xlane.f32.xlu0 %v1690
  %v1696 = vpop.xlane.xlu0 %1695
  %v1697 = vsub.f32 %v1690, %v1696
  %v1698 = vmul.f32 %v1697, 1.442695
  %v1699 = vpow.pop %v1698
  %1700 = vadd.xlane.f32.xlu0 %v1699
  %v1701 = vpop.xlane.xlu0 %1700
  %v1702 = vlog2.pop %v1701
  %v1703 = vmul.f32 %v1702, 0.6931472
  %v1704 = vsub.f32 %v1697, %v1703
  %1705 = vst [vmem:[%s6] sm:$0xff] %v1704
  // Predicated region
  $region26: #{rnn_forward.1} parent=0 // pred_check
    _
  $region27: #{rnn_forward.1} parent=0 // pred_check_branch
    %1707 = sbr.rel (0) target = $region29
  $region28: #{rnn_forward.1} parent=0 // pred_region
    _
  $region29: #{rnn_forward.1} parent=0 // pred_fallthru
    _
  // Predicated region
  $region30: #{rnn_forward.1} parent=0 // pred_check
    _
  $region31: #{rnn_forward.1} parent=0 // pred_check_branch
    %1709 = sbr.rel (0) target = $region33
  $region32: #{rnn_forward.1} parent=0 // pred_region
    _
  $region33: #{rnn_forward.1} parent=0 // pred_fallthru
    _

</llo_original>
